<compile_context>
chip_gen: v7x
topology: tpu7x:2x2x1
jax: 0.10.0
libtpu: 0.0.40
codegen_flags: <defaults>
</compile_context>

<pallas_src>
import functools

import numpy as np
import jax
import jax.numpy as jnp
from jax.experimental import pallas as pl
from jax.experimental.pallas import tpu as pltpu


def _default_activation(x):
    # TODO(synk): FMoETransformerMLP's default is torch.nn.GELU() (exact erf
    # form); the tanh approximation is used here for guaranteed Mosaic lowering
    # and differs from exact GELU at the ~1e-3 level.  Pass a different
    # callable via expert_forward(..., activation=...) to override.
    return jax.nn.gelu(x, approximate=True)


def _round_up(x, m):
    return ((int(x) + m - 1) // m) * m


# --------------------------------------------------------------------------- #
# Kernels
# --------------------------------------------------------------------------- #
def _expert_kernel_resident(be_ref,            # scalar-prefetch: block -> expert id
                            x_ref,             # (tm, d_model)          compute dtype
                            w1_ref,            # (1, d_model, d_hidden) compute dtype
                            b1_ref,            # (1, 1, d_hidden)       f32
                            w2_ref,            # (1, d_hidden, d_model) compute dtype
                            b2_ref,            # (1, 1, d_model)        f32
                            o_ref,             # (tm, d_model)          out dtype
                            *, activation):
    """kh == 1: full expert weights resident in VMEM; no accumulator scratch."""
    h = jnp.dot(x_ref[...], w1_ref[0], preferred_element_type=jnp.float32)
    h = activation(h + b1_ref[0])
    y = jnp.dot(h.astype(w2_ref.dtype), w2_ref[0],
                preferred_element_type=jnp.float32)
    o_ref[...] = (y + b2_ref[0]).astype(o_ref.dtype)


def _expert_kernel_tiled(be_ref,               # scalar-prefetch: block -> expert id
                         x_ref,                # (tm, d_model)     compute dtype
                         w1_ref,               # (1, d_model, th)  compute dtype
                         b1_ref,               # (1, kh, th)       f32 (hoisted)
                         w2_ref,               # (1, th, d_model)  compute dtype
                         b2_ref,               # (1, 1, d_model)   f32
                         o_ref,                # (tm, d_model)     out dtype
                         acc_ref,              # (tm, d_model)     f32 scratch
                         *, activation):
    """kh > 1: hidden axis tiled; f32 accumulator carries h4toh partial sums."""
    i = pl.program_id(0)
    h_idx = pl.program_id(1)
    kh = pl.num_programs(1)
    # Snaked hidden-tile index (must match the w1/w2 index_maps): even token
    # blocks walk 0..kh-1, odd ones kh-1..0, so the boundary weight tile is
    # reused across adjacent same-expert token blocks (pipeliner skips re-DMA).
    h_eff = h_idx + (i % 2) * (kh - 1 - 2 * h_idx)

    @pl.when(h_idx == 0)
    def _init():
        acc_ref[...] = jnp.zeros_like(acc_ref)

    h = jnp.dot(x_ref[...], w1_ref[0], preferred_element_type=jnp.float32)
    b1 = b1_ref[0, pl.ds(h_eff, 1), :]                       # (1, th), f32
    h = activation(h + b1)
    acc_ref[...] += jnp.dot(h.astype(w2_ref.dtype), w2_ref[0],
                            preferred_element_type=jnp.float32)

    @pl.when(h_idx == kh - 1)
    def _finalize():
        o_ref[...] = (acc_ref[...] + b2_ref[0]).astype(o_ref.dtype)


# --------------------------------------------------------------------------- #
# One-time parameter preparation (do this OUTSIDE the per-step hot path).
# FMoELinear stores weight as [E, d_out, d_in]; transpose to [E, d_in, d_out]
# so the kernel runs plain (M,K)@(K,N) contractions, and cast to bf16 to halve
# the HBM->VMEM weight traffic (accumulation stays f32).
# TODO(synk): on v7x, fp8 weights with a per-expert scale would halve weight
# traffic again; not implemented here.
# --------------------------------------------------------------------------- #
def prepare_expert_params(w1, b1, w2, b2, *, compute_dtype=jnp.bfloat16):
    num_expert, d_hidden, d_model = w1.shape
    assert w2.shape == (num_expert, d_model, d_hidden)
    w1t = jnp.transpose(w1, (0, 2, 1)).astype(compute_dtype)   # [E, d_model, d_hidden]
    w2t = jnp.transpose(w2, (0, 2, 1)).astype(compute_dtype)   # [E, d_hidden, d_model]
    b1r = b1.reshape(num_expert, 1, d_hidden).astype(jnp.float32)
    b2r = b2.reshape(num_expert, 1, d_model).astype(jnp.float32)
    return w1t, b1r, w2t, b2r


# --------------------------------------------------------------------------- #
# Tile / VMEM budgeting
# --------------------------------------------------------------------------- #
def _vmem_capacity_and_budget():
    cap = 64 << 20          # conservative fallback (v7x-sized VMEM)
    try:
        info = pltpu.get_tpu_info()
        cap = int(getattr(info, "vmem_capacity_bytes", cap) or cap)
    except Exception:
        pass
    # Leave ~20% headroom for compiler-internal scratch:
    #   v5e/v6e (128 MiB) -> ~102 MiB;  v7x (64 MiB) -> ~51 MiB.
    return cap, int(cap * 0.8)


def _pick_th(d_hidden, d_model, cp_b, weight_budget, th):
    if th is not None:
        assert th % 128 == 0 and d_hidden % th == 0, \
            "th must be a multiple of 128 dividing d_hidden"
        return th

    def w_need(t):          # double-buffered w1 + w2 tiles
        return 2 * 2 * d_model * t * cp_b

    if w_need(d_hidden) <= weight_budget:
        return d_hidden     # fully resident weights -> kh == 1
    cands = [t for t in range(128, d_hidden, 128)
             if d_hidden % t == 0 and w_need(t) <= weight_budget]
    # Largest feasible (>= 256 preferred for the 256-wide v6e/v7x MXUs).
    return max(cands) if cands else 128


def _pick_tm(counts, tm, d_model, cp_b, out_b, act_budget, needs_acc):
    max_count = int(counts.max()) if counts.size else 0
    if tm is None:
        per_row = d_model * (2 * cp_b + 2 * out_b + (4 if needs_acc else 0))
        tm_vmem = max(8, (int(act_budget) // max(per_row, 1)) // 8 * 8)
        tm = int(min(tm_vmem, 1024, _round_up(max(max_count, 8), 8)))
        tm = max(tm, 8)
    assert tm % 8 == 0, "tm must be a multiple of 8 (sublane tiling)"
    return tm


# --------------------------------------------------------------------------- #
# Forward pass.
# `fwd_expert_count` is consumed as a host-static array (FMoE keeps it on CPU);
# distinct routing patterns retrace.
# --------------------------------------------------------------------------- #
def expert_forward(inp, fwd_expert_count, w1t, b1r, w2t, b2r, *,
                   activation=_default_activation,
                   tm=None, th=None, compute_dtype=jnp.bfloat16):
    """inp: [T, d_model], tokens sorted by expert.
       w1t/b1r/w2t/b2r: outputs of prepare_expert_params()."""
    num_expert, d_model, d_hidden = w1t.shape
    assert d_model % 128 == 0, "d_model must be a multiple of 128 (lane-dense tiles)"
    assert d_hidden % 128 == 0, "d_hidden must be a multiple of 128 (lane-dense tiles)"

    counts = np.asarray(fwd_expert_count, dtype=np.int64)
    assert counts.sum() == inp.shape[0]
    out_dtype = inp.dtype

    if int(counts.sum()) == 0:
        return jnp.zeros((0, d_model), dtype=out_dtype)

    cp_b = jnp.dtype(compute_dtype).itemsize
    out_b = jnp.dtype(out_dtype).itemsize
    cap, budget = _vmem_capacity_and_budget()

    # --- tile selection, sized from the real VMEM budget ---
    weight_budget = int(budget * 0.6)
    th = _pick_th(d_hidden, d_model, cp_b, weight_budget, th)
    kh = d_hidden // th
    weight_need = 2 * 2 * d_model * th * cp_b + 2 * (d_hidden + d_model) * 4
    act_budget = max(budget - weight_need, 1 << 20)
    tm = _pick_tm(counts, tm, d_model, cp_b, out_b, act_budget, needs_acc=(kh > 1))

    # ---- plain-JAX glue: pad each expert's token range to a multiple of tm ----
    offsets = np.concatenate([[0], np.cumsum(counts)])
    pad_counts = ((counts + tm - 1) // tm) * tm
    pad_offsets = np.concatenate([[0], np.cumsum(pad_counts)])
    total_pad = int(pad_offsets[-1])
    n_blocks = total_pad // tm
    if n_blocks == 0:
        return jnp.zeros((0, d_model), dtype=out_dtype)

    gather_idx = np.zeros(total_pad, dtype=np.int32)
    valid = np.zeros(total_pad, dtype=bool)
    block_to_expert = np.zeros(n_blocks, dtype=np.int32)
    for e in range(num_expert):
        n = int(counts[e])
        if n > 0:
            gather_idx[pad_offsets[e]:pad_offsets[e] + n] = \
                np.arange(offsets[e], offsets[e] + n)
            valid[pad_offsets[e]:pad_offsets[e] + n] = True
        block_to_expert[pad_offsets[e] // tm: pad_offsets[e + 1] // tm] = e

    # Cast activations to the compute dtype HERE (halves x-tile HBM traffic).
    x_pad = jnp.take(inp, jnp.asarray(gather_idx), axis=0).astype(compute_dtype)
    be = jnp.asarray(block_to_expert, dtype=jnp.int32)

    # ---- VMEM need for the chosen tiling (double-buffered ins/outs) ----
    need = (2 * tm * d_model * cp_b            # x
            + 2 * d_model * th * cp_b          # w1 tile
            + 2 * d_hidden * 4                 # b1 (full, hoisted)
            + 2 * th * d_model * cp_b          # w2 tile
            + 2 * d_model * 4                  # b2
            + 2 * tm * d_model * out_b)        # out
    if kh > 1:
        need += tm * d_model * 4               # f32 accumulator scratch
    vmem_limit = int(min(max(int(need * 1.25), 32 << 20), budget))
    if need > vmem_limit:
        vmem_limit = int(min(need + (4 << 20), cap))

    # ---- Pallas call ----
    if kh == 1:
        kernel = functools.partial(_expert_kernel_resident, activation=activation)
        out_pad = pl.pallas_call(
            kernel,
            out_shape=jax.ShapeDtypeStruct((total_pad, d_model), out_dtype),
            grid_spec=pltpu.PrefetchScalarGridSpec(
                num_scalar_prefetch=1,
                grid=(n_blocks,),
                in_specs=[
                    pl.BlockSpec((tm, d_model), lambda i, be: (i, 0)),
                    pl.BlockSpec((1, d_model, d_hidden), lambda i, be: (be[i], 0, 0)),
                    pl.BlockSpec((1, 1, d_hidden), lambda i, be: (be[i], 0, 0)),
                    pl.BlockSpec((1, d_hidden, d_model), lambda i, be: (be[i], 0, 0)),
                    pl.BlockSpec((1, 1, d_model), lambda i, be: (be[i], 0, 0)),
                ],
                out_specs=pl.BlockSpec((tm, d_model), lambda i, be: (i, 0)),
            ),
            compiler_params=pltpu.CompilerParams(
                dimension_semantics=("parallel",),
                vmem_limit_bytes=vmem_limit),
        )(be, x_pad, w1t, b1r, w2t, b2r)
    else:
        b1k = b1r.reshape(num_expert, kh, th)   # hoisted bias, sliced in-kernel

        def _snake(i, h):                       # matches the kernel's h_eff
            return h + (i % 2) * (kh - 1 - 2 * h)

        kernel = functools.partial(_expert_kernel_tiled, activation=activation)
        out_pad = pl.pallas_call(
            kernel,
            out_shape=jax.ShapeDtypeStruct((total_pad, d_model), out_dtype),
            grid_spec=pltpu.PrefetchScalarGridSpec(
                num_scalar_prefetch=1,
                grid=(n_blocks, kh),
                in_specs=[
                    pl.BlockSpec((tm, d_model), lambda i, h, be: (i, 0)),
                    pl.BlockSpec((1, d_model, th),
                                 lambda i, h, be: (be[i], 0, _snake(i, h))),
                    pl.BlockSpec((1, kh, th), lambda i, h, be: (be[i], 0, 0)),
                    pl.BlockSpec((1, th, d_model),
                                 lambda i, h, be: (be[i], _snake(i, h), 0)),
                    pl.BlockSpec((1, 1, d_model), lambda i, h, be: (be[i], 0, 0)),
                ],
                out_specs=pl.BlockSpec((tm, d_model), lambda i, h, be: (i, 0)),
                scratch_shapes=[pltpu.VMEM((tm, d_model), jnp.float32)],
            ),
            compiler_params=pltpu.CompilerParams(
                dimension_semantics=("parallel", "arbitrary"),
                vmem_limit_bytes=vmem_limit),
        )(be, x_pad, w1t, b1k, w2t, b2r)

    # drop padding rows (token order is preserved)
    keep = jnp.asarray(np.nonzero(valid)[0], dtype=jnp.int32)
    return jnp.take(out_pad, keep, axis=0)


# --------------------------------------------------------------------------- #
# Pure-JAX reference (mirrors the kernel's bf16-operand / f32-accumulate math).
# --------------------------------------------------------------------------- #
def expert_reference(inp, fwd_expert_count, w1, b1, w2, b2, *,
                     activation=_default_activation, compute_dtype=jnp.bfloat16):
    counts = np.asarray(fwd_expert_count, dtype=np.int64)
    offs = np.concatenate([[0], np.cumsum(counts)])
    outs = []
    for e in range(w1.shape[0]):
        xs = inp[int(offs[e]):int(offs[e + 1])]
        h = jnp.dot(xs.astype(compute_dtype), w1[e].T.astype(compute_dtype),
                    preferred_element_type=jnp.float32) + b1[e].astype(jnp.float32)
        h = activation(h)
        y = jnp.dot(h.astype(compute_dtype), w2[e].T.astype(compute_dtype),
                    preferred_element_type=jnp.float32) + b2[e].astype(jnp.float32)
        outs.append(y.astype(inp.dtype))
    return jnp.concatenate(outs, axis=0)


if __name__ == "__main__":
    # Small but lane-dense shapes (d_model, d_hidden multiples of 128).
    num_expert, d_model, d_hidden = 4, 128, 512
    # tokens per expert: includes an empty expert and ragged tails
    fwd_expert_count = np.array([40, 0, 129, 7], dtype=np.int64)
    T = int(fwd_expert_count.sum())                              # 176 tokens

    key = jax.random.PRNGKey(0)
    k_in, k_w1, k_b1, k_w2, k_b2 = jax.random.split(key, 5)
    inp = jax.random.normal(k_in, (T, d_model), dtype=jnp.float32)
    # FMoELinear parameter shapes: weight [E, d_out, d_in], bias [E, d_out]
    w1 = jax.random.normal(k_w1, (num_expert, d_hidden, d_model), jnp.float32) * 0.05
    b1 = jax.random.normal(k_b1, (num_expert, d_hidden), jnp.float32) * 0.05
    w2 = jax.random.normal(k_w2, (num_expert, d_model, d_hidden), jnp.float32) * 0.05
    b2 = jax.random.normal(k_b2, (num_expert, d_model), jnp.float32) * 0.05

    # one-time weight prep (outside the hot path)
    w1t, b1r, w2t, b2r = prepare_expert_params(w1, b1, w2, b2)

    # Default path: weights fit VMEM -> th = d_hidden, kh = 1 (resident kernel).
    out_res = expert_forward(inp, fwd_expert_count, w1t, b1r, w2t, b2r)
    out_res = jax.block_until_ready(out_res)

    # Forced hidden tiling (th=128 -> kh=4) exercises the snaked accumulator path.
    out_tiled = expert_forward(inp, fwd_expert_count, w1t, b1r, w2t, b2r, th=128)
    out_tiled = jax.block_until_ready(out_tiled)

    ref = expert_reference(inp, fwd_expert_count, w1, b1, w2, b2)
    assert out_res.shape == (T, d_model) and out_tiled.shape == (T, d_model)
    np.testing.assert_allclose(np.asarray(out_res), np.asarray(ref),
                               rtol=2e-3, atol=2e-3)
    np.testing.assert_allclose(np.asarray(out_tiled), np.asarray(ref),
                               rtol=2e-3, atol=2e-3)

    print("KERNEL_OK")
</pallas_src>

<mosaic_0001>
module attributes {stable_mosaic.version = 11 : i64} {
  func.func @_expert_kernel_resident(%arg0: i32, %arg1: memref<3xi32, #tpu.memory_space<smem>>, %arg2: memref<136x128xbf16, #tpu.memory_space<vmem>>, %arg3: memref<1x128x512xbf16, #tpu.memory_space<vmem>>, %arg4: memref<1x1x512xf32, #tpu.memory_space<vmem>>, %arg5: memref<1x512x128xbf16, #tpu.memory_space<vmem>>, %arg6: memref<1x1x128xf32, #tpu.memory_space<vmem>>, %arg7: memref<136x128xf32, #tpu.memory_space<vmem>>) attributes {dimension_semantics = [#tpu.dimension_semantics<parallel>], iteration_bounds = array<i64: 3>, scalar_prefetch = 1 : i64, scratch_operands = 0 : i64, tpu.core_type = #tpu.core_type<tc>, window_params = [{transform_indices = @transform_0, window_bounds = array<i64: 136, 128>}, {transform_indices = @transform_1, window_bounds = array<i64: 1, 128, 512>}, {transform_indices = @transform_2, window_bounds = array<i64: 1, 1, 512>}, {transform_indices = @transform_3, window_bounds = array<i64: 1, 512, 128>}, {transform_indices = @transform_4, window_bounds = array<i64: 1, 1, 128>}, {transform_indices = @transform_5, window_bounds = array<i64: 136, 128>}]} {
    %c0 = arith.constant 0 : index
    %c0_0 = arith.constant 0 : index
    %0 = vector.load %arg2[%c0, %c0_0] : memref<136x128xbf16, #tpu.memory_space<vmem>>, vector<136x128xbf16>
    %c0_1 = arith.constant 0 : index
    %c0_2 = arith.constant 0 : index
    %c0_3 = arith.constant 0 : index
    %1 = vector.load %arg3[%c0_1, %c0_2, %c0_3] : memref<1x128x512xbf16, #tpu.memory_space<vmem>>, vector<1x128x512xbf16>
    %2 = vector.shape_cast %1 : vector<1x128x512xbf16> to vector<128x512xbf16>
    %cst = arith.constant dense<0.000000e+00> : vector<136x512xf32>
    %3 = tpu.matmul %0, %2, %cst {dimension_numbers = #tpu.dot_dimension_numbers<[1], [0], [0], [1], [0, 0, 1, 1], [], []>} : vector<136x128xbf16>, vector<128x512xbf16>, vector<136x512xf32> -> vector<136x512xf32>
    %c0_4 = arith.constant 0 : index
    %c0_5 = arith.constant 0 : index
    %c0_6 = arith.constant 0 : index
    %4 = vector.load %arg4[%c0_4, %c0_5, %c0_6] : memref<1x1x512xf32, #tpu.memory_space<vmem>>, vector<1x1x512xf32>
    %5 = vector.shape_cast %4 : vector<1x1x512xf32> to vector<1x512xf32>
    %6 = vector.broadcast %5 : vector<1x512xf32> to vector<136x512xf32>
    %7 = arith.addf %3, %6 : vector<136x512xf32>
    %8 = arith.mulf %7, %7 : vector<136x512xf32>
    %9 = arith.mulf %7, %8 : vector<136x512xf32>
    %cst_7 = arith.constant 4.471500e-02 : f32
    %10 = vector.broadcast %cst_7 : f32 to vector<136x512xf32>
    %11 = arith.mulf %10, %9 : vector<136x512xf32>
    %12 = arith.addf %7, %11 : vector<136x512xf32>
    %cst_8 = arith.constant 0.797884583 : f32
    %13 = vector.broadcast %cst_8 : f32 to vector<136x512xf32>
    %14 = arith.mulf %13, %12 : vector<136x512xf32>
    %15 = math.tanh %14 : vector<136x512xf32>
    %cst_9 = arith.constant 1.000000e+00 : f32
    %16 = vector.broadcast %cst_9 : f32 to vector<136x512xf32>
    %17 = arith.addf %16, %15 : vector<136x512xf32>
    %cst_10 = arith.constant 5.000000e-01 : f32
    %18 = vector.broadcast %cst_10 : f32 to vector<136x512xf32>
    %19 = arith.mulf %18, %17 : vector<136x512xf32>
    %20 = arith.mulf %7, %19 : vector<136x512xf32>
    %21 = arith.truncf %20 : vector<136x512xf32> to vector<136x512xbf16>
    %c0_11 = arith.constant 0 : index
    %c0_12 = arith.constant 0 : index
    %c0_13 = arith.constant 0 : index
    %22 = vector.load %arg5[%c0_11, %c0_12, %c0_13] : memref<1x512x128xbf16, #tpu.memory_space<vmem>>, vector<1x512x128xbf16>
    %23 = vector.shape_cast %22 : vector<1x512x128xbf16> to vector<512x128xbf16>
    %cst_14 = arith.constant dense<0.000000e+00> : vector<136x128xf32>
    %24 = tpu.matmul %21, %23, %cst_14 {dimension_numbers = #tpu.dot_dimension_numbers<[1], [0], [0], [1], [0, 0, 1, 1], [], []>} : vector<136x512xbf16>, vector<512x128xbf16>, vector<136x128xf32> -> vector<136x128xf32>
    %c0_15 = arith.constant 0 : index
    %c0_16 = arith.constant 0 : index
    %c0_17 = arith.constant 0 : index
    %25 = vector.load %arg6[%c0_15, %c0_16, %c0_17] : memref<1x1x128xf32, #tpu.memory_space<vmem>>, vector<1x1x128xf32>
    %26 = vector.shape_cast %25 : vector<1x1x128xf32> to vector<1x128xf32>
    %27 = vector.broadcast %26 : vector<1x128xf32> to vector<136x128xf32>
    %28 = arith.addf %24, %27 : vector<136x128xf32>
    %c0_18 = arith.constant 0 : index
    %c0_19 = arith.constant 0 : index
    %29 = vector.load %arg7[%c0_18, %c0_19] : memref<136x128xf32, #tpu.memory_space<vmem>>, vector<136x128xf32>
    tpu.vector_store %arg7[%c0_18, %c0_19], %28 {strides = array<i32>} : memref<136x128xf32, #tpu.memory_space<vmem>>, vector<136x128xf32>,
    return
  }
  func.func @transform_0(%arg0: i32, %arg1: memref<3xi32, #tpu.memory_space<smem>>) -> (i32, i32) {
    %c0_i32 = arith.constant 0 : i32
    %c0_i32_0 = arith.constant 0 : i32
    return %arg0, %c0_i32 : i32, i32
  }
  func.func @transform_1(%arg0: i32, %arg1: memref<3xi32, #tpu.memory_space<smem>>) -> (i32, i32, i32) {
    %0 = arith.index_cast %arg0 : i32 to index
    %1 = memref.load %arg1[%0] : memref<3xi32, #tpu.memory_space<smem>>
    %c0_i32 = arith.constant 0 : i32
    %c0_i32_0 = arith.constant 0 : i32
    %c0_i32_1 = arith.constant 0 : i32
    return %1, %c0_i32, %c0_i32_0 : i32, i32, i32
  }
  func.func @transform_2(%arg0: i32, %arg1: memref<3xi32, #tpu.memory_space<smem>>) -> (i32, i32, i32) {
    %0 = arith.index_cast %arg0 : i32 to index
    %1 = memref.load %arg1[%0] : memref<3xi32, #tpu.memory_space<smem>>
    %c0_i32 = arith.constant 0 : i32
    %c0_i32_0 = arith.constant 0 : i32
    %c0_i32_1 = arith.constant 0 : i32
    return %1, %c0_i32, %c0_i32_0 : i32, i32, i32
  }
  func.func @transform_3(%arg0: i32, %arg1: memref<3xi32, #tpu.memory_space<smem>>) -> (i32, i32, i32) {
    %0 = arith.index_cast %arg0 : i32 to index
    %1 = memref.load %arg1[%0] : memref<3xi32, #tpu.memory_space<smem>>
    %c0_i32 = arith.constant 0 : i32
    %c0_i32_0 = arith.constant 0 : i32
    %c0_i32_1 = arith.constant 0 : i32
    return %1, %c0_i32, %c0_i32_0 : i32, i32, i32
  }
  func.func @transform_4(%arg0: i32, %arg1: memref<3xi32, #tpu.memory_space<smem>>) -> (i32, i32, i32) {
    %0 = arith.index_cast %arg0 : i32 to index
    %1 = memref.load %arg1[%0] : memref<3xi32, #tpu.memory_space<smem>>
    %c0_i32 = arith.constant 0 : i32
    %c0_i32_0 = arith.constant 0 : i32
    %c0_i32_1 = arith.constant 0 : i32
    return %1, %c0_i32, %c0_i32_0 : i32, i32, i32
  }
  func.func @transform_5(%arg0: i32, %arg1: memref<3xi32, #tpu.memory_space<smem>>) -> (i32, i32) {
    %c0_i32 = arith.constant 0 : i32
    %c0_i32_0 = arith.constant 0 : i32
    return %arg0, %c0_i32 : i32, i32
  }
}

</mosaic_0001>

<llo_original>
// kernel: tpu_custom_call.1
$region0: #{tpu_custom_call.1}
  #allocation0 [shape = 'u32[]', space=smem, size = 0x4, offset = 0x4, fixed_abs, tag = 'smem constant byte address 0x4 - core index']
  #allocation1 [shape = 'u32[144,128]{1,0:T(1,128)}', space=vmem, size = 0x12000, scoped, tag = 'internal scratch']
  #allocation2 [shape = 's32[1]{0}', space=sflag, size = 0x4, scoped, tag = 'scoped memory for tpu_custom_call.1']
  #allocation3 [shape = 'u8[512]{0}', space=smem, size = 0x200, scoped, tag = 'prefetched SMEM operand 0']
  %s0 = inlined_call_operand.hbm [shape: s32[3], index: 0, kind: input, shape index: {}]
  %s1 = inlined_call_operand.hbm [shape: bf16[408,128], index: 1, kind: input, shape index: {}]
  %s2 = inlined_call_operand.hbm [shape: bf16[4,128,512], index: 2, kind: input, shape index: {}]
  %s3 = inlined_call_operand.hbm [shape: f32[4,1,512], index: 3, kind: input, shape index: {}]
  %s4 = inlined_call_operand.hbm [shape: bf16[4,512,128], index: 4, kind: input, shape index: {}]
  %s5 = inlined_call_operand.vmem [shape: f32[4,1,128], index: 5, kind: input, shape index: {}]
  %s6 = inlined_call_operand.hbm [shape: f32[408,128], index: 6, kind: output, shape index: {}]
  %s7 = sld [smem:[#allocation0]]
  $region69: #{tpu_custom_call.1} parent=0
    _
  %s9 = ssub.s32 1, %s7
  %s10 = scalar_select 0, %s9, %s7
  %12 = dma.hbm_to_smem %s0, 16, [#allocation3], [#allocation2]
  %13 = dma.done [#allocation2], 16
  %14 = sfence
  $region1: #{tpu_custom_call.1} parent=0
    #allocation4 [shape = 'u8[69632]{0}', space=vmem, size = 0x11000, scoped, tag = 'input window, operand 1']
    #allocation5 [shape = 's32[2]{0}', space=sflag, size = 0x8, scoped, tag = 'scoped memory for tpu_custom_call.1']
    #allocation6 [shape = 's32[2]{0}', space=sflag, size = 0x8, scoped, tag = 'scoped memory for tpu_custom_call.1']
    #allocation7 [shape = 'u8[262144]{0}', space=vmem, size = 0x40000, scoped, tag = 'input window, operand 2']
    #allocation8 [shape = 's32[2]{0}', space=sflag, size = 0x8, scoped, tag = 'scoped memory for tpu_custom_call.1']
    #allocation9 [shape = 'u8[4096]{0}', space=vmem, size = 0x1000, scoped, tag = 'input window, operand 3']
    #allocation10 [shape = 'u8[262144]{0}', space=vmem, size = 0x40000, scoped, tag = 'input window, operand 4']
    #allocation11 [shape = 's32[2]{0}', space=sflag, size = 0x8, scoped, tag = 'scoped memory for tpu_custom_call.1']
    #allocation12 [shape = 'u8[139264]{0}', space=vmem, size = 0x22000, scoped, tag = 'output window, operand 0']
    %15 = vsyncpa [#allocation5], 0
    %s16 = scalar_lea.sflag [#allocation5], 1
    %17 = vsyncpa %s16, 0
    %18 = vsyncpa [#allocation8], 0
    %s19 = scalar_lea.sflag [#allocation8], 1
    %20 = vsyncpa %s19, 0
    %21 = vsyncpa [#allocation11], 0
    %s22 = scalar_lea.sflag [#allocation11], 1
    %23 = vsyncpa %s22, 0
    %24 = vsyncpa [#allocation6], 0
    %s25 = scalar_lea.sflag [#allocation6], 1
    %26 = vsyncpa %s25, 0
    loop: start=0, step=1, limit=5
    $region2: #{tpu_custom_call.1} parent=1 // loop_pre_header
      _
    $region3: #{tpu_custom_call.1} parent=1 // loop_header
      %s28 = sphi 0, %s32
      %p29 = scmp.ge.s32.totalorder %s28, 5
      %s38 = sphi 0, %s40
      %s41 = sphi 0, %s38
      %s42 = sphi 0, %s41
      %s58 = sphi 0, %s42
      %s66 = sphi 0, %s68
      %s69 = sphi 0, %s66
      %s70 = sphi 0, %s69
      %s86 = sphi 0, %s70
      %s94 = sphi 0, %s96
      %s97 = sphi 0, %s94
      %s98 = sphi 0, %s97
      %s114 = sphi 0, %s98
      %s122 = sphi 0, %s124
      %s125 = sphi 0, %s122
      %s126 = sphi 0, %s125
      %s142 = sphi 0, %s126
      %s150 = sphi 0, %s152
      %s153 = sphi 0, %s150
      %s154 = sphi 0, %s153
      %s170 = sphi 0, %s154
      %s176 = sphi 0, %s178
      %s179 = sphi 0, %s176
      %s180 = sphi 0, %s179
      %s196 = sphi 0, %s180
    $region4: #{tpu_custom_call.1} parent=1 // loop_header_branch
      %31 = sbr.rel (%p29) target = $region8
    $region5: #{tpu_custom_call.1} parent=1 // loop_body
      %s33 = ssub.s32 %s28, 1
      %s34 = ssub.s32 %s28, 2
      %s35 = sadd.s32 %s28, 1
      %s36 = ssub.s32 %s28, %s35
      %p37 = scmp.eq.s32.totalorder %s36, 0
      %s39 = sadd.s32 %s38, 1
      %s40 = scalar_select %p37, %s38, %s39
      %p43 = pneg %p37
      %p44 = scmp.eq.s32.totalorder %s28, 2
      %p45 = por %p43, %p44
      %p46 = scmp.ne.s32.totalorder %s38, %s41
      %p47 = scmp.eq.s32.totalorder %s28, 0
      %p48 = por %p46, %p47
      %p49 = scmp.ne.s32.totalorder %s38, %s41
      %p50 = scmp.eq.s32.totalorder %s33, 2
      %p51 = por %p49, %p50
      %p52 = scmp.ne.s32.totalorder %s41, %s42
      %p53 = scmp.eq.s32.totalorder %s33, 0
      %p54 = por %p52, %p53
      %p55 = scmp.ne.s32.totalorder %s41, %s42
      %p56 = scmp.eq.s32.totalorder %s34, 2
      %p57 = por %p55, %p56
      %p59 = scmp.ne.s32.totalorder %s42, %s58
      %p60 = scmp.eq.s32.totalorder %s34, 0
      %p61 = por %p59, %p60
      %s62 = sld [smem:[#allocation3 + %s28]]
      %s63 = sld [smem:[#allocation3 + %s35]]
      %s64 = ssub.s32 %s62, %s63
      %p65 = scmp.eq.s32.totalorder %s64, 0
      %s67 = sadd.s32 %s66, 1
      %s68 = scalar_select %p65, %s66, %s67
      %p71 = pneg %p65
      %p72 = scmp.eq.s32.totalorder %s28, 2
      %p73 = por %p71, %p72
      %p74 = scmp.ne.s32.totalorder %s66, %s69
      %p75 = scmp.eq.s32.totalorder %s28, 0
      %p76 = por %p74, %p75
      %p77 = scmp.ne.s32.totalorder %s66, %s69
      %p78 = scmp.eq.s32.totalorder %s33, 2
      %p79 = por %p77, %p78
      %p80 = scmp.ne.s32.totalorder %s69, %s70
      %p81 = scmp.eq.s32.totalorder %s33, 0
      %p82 = por %p80, %p81
      %p83 = scmp.ne.s32.totalorder %s69, %s70
      %p84 = scmp.eq.s32.totalorder %s34, 2
      %p85 = por %p83, %p84
      %p87 = scmp.ne.s32.totalorder %s70, %s86
      %p88 = scmp.eq.s32.totalorder %s34, 0
      %p89 = por %p87, %p88
      %s90 = sld [smem:[#allocation3 + %s28]]
      %s91 = sld [smem:[#allocation3 + %s35]]
      %s92 = ssub.s32 %s90, %s91
      %p93 = scmp.eq.s32.totalorder %s92, 0
      %s95 = sadd.s32 %s94, 1
      %s96 = scalar_select %p93, %s94, %s95
      %p99 = pneg %p93
      %p100 = scmp.eq.s32.totalorder %s28, 2
      %p101 = por %p99, %p100
      %p102 = scmp.ne.s32.totalorder %s94, %s97
      %p103 = scmp.eq.s32.totalorder %s28, 0
      %p104 = por %p102, %p103
      %p105 = scmp.ne.s32.totalorder %s94, %s97
      %p106 = scmp.eq.s32.totalorder %s33, 2
      %p107 = por %p105, %p106
      %p108 = scmp.ne.s32.totalorder %s97, %s98
      %p109 = scmp.eq.s32.totalorder %s33, 0
      %p110 = por %p108, %p109
      %p111 = scmp.ne.s32.totalorder %s97, %s98
      %p112 = scmp.eq.s32.totalorder %s34, 2
      %p113 = por %p111, %p112
      %p115 = scmp.ne.s32.totalorder %s98, %s114
      %p116 = scmp.eq.s32.totalorder %s34, 0
      %p117 = por %p115, %p116
      %s118 = sld [smem:[#allocation3 + %s28]]
      %s119 = sld [smem:[#allocation3 + %s35]]
      %s120 = ssub.s32 %s118, %s119
      %p121 = scmp.eq.s32.totalorder %s120, 0
      %s123 = sadd.s32 %s122, 1
      %s124 = scalar_select %p121, %s122, %s123
      %p127 = pneg %p121
      %p128 = scmp.eq.s32.totalorder %s28, 2
      %p129 = por %p127, %p128
      %p130 = scmp.ne.s32.totalorder %s122, %s125
      %p131 = scmp.eq.s32.totalorder %s28, 0
      %p132 = por %p130, %p131
      %p133 = scmp.ne.s32.totalorder %s122, %s125
      %p134 = scmp.eq.s32.totalorder %s33, 2
      %p135 = por %p133, %p134
      %p136 = scmp.ne.s32.totalorder %s125, %s126
      %p137 = scmp.eq.s32.totalorder %s33, 0
      %p138 = por %p136, %p137
      %p139 = scmp.ne.s32.totalorder %s125, %s126
      %p140 = scmp.eq.s32.totalorder %s34, 2
      %p141 = por %p139, %p140
      %p143 = scmp.ne.s32.totalorder %s126, %s142
      %p144 = scmp.eq.s32.totalorder %s34, 0
      %p145 = por %p143, %p144
      %s146 = sld [smem:[#allocation3 + %s28]]
      %s147 = sld [smem:[#allocation3 + %s35]]
      %s148 = ssub.s32 %s146, %s147
      %p149 = scmp.eq.s32.totalorder %s148, 0
      %s151 = sadd.s32 %s150, 1
      %s152 = scalar_select %p149, %s150, %s151
      %p155 = pneg %p149
      %p156 = scmp.eq.s32.totalorder %s28, 2
      %p157 = por %p155, %p156
      %p158 = scmp.ne.s32.totalorder %s150, %s153
      %p159 = scmp.eq.s32.totalorder %s28, 0
      %p160 = por %p158, %p159
      %p161 = scmp.ne.s32.totalorder %s150, %s153
      %p162 = scmp.eq.s32.totalorder %s33, 2
      %p163 = por %p161, %p162
      %p164 = scmp.ne.s32.totalorder %s153, %s154
      %p165 = scmp.eq.s32.totalorder %s33, 0
      %p166 = por %p164, %p165
      %p167 = scmp.ne.s32.totalorder %s153, %s154
      %p168 = scmp.eq.s32.totalorder %s34, 2
      %p169 = por %p167, %p168
      %p171 = scmp.ne.s32.totalorder %s154, %s170
      %p172 = scmp.eq.s32.totalorder %s34, 0
      %p173 = por %p171, %p172
      %s174 = ssub.s32 %s28, %s35
      %p175 = scmp.eq.s32.totalorder %s174, 0
      %s177 = sadd.s32 %s176, 1
      %s178 = scalar_select %p175, %s176, %s177
      %p181 = pneg %p175
      %p182 = scmp.eq.s32.totalorder %s28, 2
      %p183 = por %p181, %p182
      %p184 = scmp.ne.s32.totalorder %s176, %s179
      %p185 = scmp.eq.s32.totalorder %s28, 0
      %p186 = por %p184, %p185
      %p187 = scmp.ne.s32.totalorder %s176, %s179
      %p188 = scmp.eq.s32.totalorder %s33, 2
      %p189 = por %p187, %p188
      %p190 = scmp.ne.s32.totalorder %s179, %s180
      %p191 = scmp.eq.s32.totalorder %s33, 0
      %p192 = por %p190, %p191
      %p193 = scmp.ne.s32.totalorder %s179, %s180
      %p194 = scmp.eq.s32.totalorder %s34, 2
      %p195 = por %p193, %p194
      %p197 = scmp.ne.s32.totalorder %s180, %s196
      %p198 = scmp.eq.s32.totalorder %s34, 0
      %p199 = por %p197, %p198
      %p200 = scmp.le.s32.totalorder 1, %s28
      %p201 = scmp.lt.s32.totalorder %s28, 4
      %p202 = pnand %p200, %p201
      %p203 = pneg %p202
      // Predicated region
      $region9: #{tpu_custom_call.1} parent=5 // pred_check
        _
      $region10: #{tpu_custom_call.1} parent=5 // pred_check_branch
        %205 = sbr.rel (%p202) target = $region12
      $region11: #{tpu_custom_call.1} parent=5 // pred_region
        %s206 = ssub.s32 %s28, 1
      $region12: #{tpu_custom_call.1} parent=5 // pred_fallthru
        _
      %p207 = scmp.lt.s32.totalorder %s28, 3
      // Predicated region
      $region13: #{tpu_custom_call.1} parent=5 // pred_check
        %p208 = pneg %p207
      $region14: #{tpu_custom_call.1} parent=5 // pred_check_branch
        %210 = sbr.rel (%p208) target = $region16
      $region15: #{tpu_custom_call.1} parent=5 // pred_region
        // Predicated region
        $region17: #{tpu_custom_call.1} parent=15 // pred_check
          %p211 = pneg %p48
        $region18: #{tpu_custom_call.1} parent=15 // pred_check_branch
          %213 = sbr.rel (%p211) target = $region20
        $region19: #{tpu_custom_call.1} parent=15 // pred_region
          %s214 = sand.u32 %s38, 1
          %s215 = scalar_lea.sflag [#allocation5], %s214
          %s216 = sand.u32 %s38, 1
          %s217 = smul.addr %s216, 68
          %s218 = scalar_lea.vmem [#allocation4], %s217
          %s219 = smul.u32 17, %s28
          %s221 = ssub.s32 1088, 1088
          %222 = vsyncadd %s215, %s221
          %s223 = smul.addr %s219, 64
          %s224 = scalar_lea.hbm %s1, %s223
          %s225 = sshll.u32 %s218, 4
          %s226 = int_to_ptr.vmem [resolvable:$true] %s225
          %231 = dma.hbm_to_vmem [thread:$0]  %s224, 1088, %s226, %s215, 64, 64, 4
        $region20: #{tpu_custom_call.1} parent=15 // pred_fallthru
          _
        // Predicated region
        $region21: #{tpu_custom_call.1} parent=15 // pred_check
          %p232 = pneg %p76
        $region22: #{tpu_custom_call.1} parent=15 // pred_check_branch
          %234 = sbr.rel (%p232) target = $region24
        $region23: #{tpu_custom_call.1} parent=15 // pred_region
          %s235 = sand.u32 %s28, 1
          %s236 = scalar_lea.sflag [#allocation8], %s235
          %s237 = sand.u32 %s66, 1
          %s238 = smul.addr %s237, 256
          %s239 = scalar_lea.vmem [#allocation7], %s238
          %s240 = sld [smem:[#allocation3 + %s28]]
          %s242 = ssub.s32 4096, 4096
          %243 = vsyncadd %s236, %s242
          %s244 = smul.addr %s240, 64
          %s245 = smul.addr %s244, 64
          %s246 = scalar_lea.hbm %s2, %s245
          %s247 = sshll.u32 %s239, 4
          %s248 = int_to_ptr.vmem [resolvable:$true] %s247
          %253 = dma.hbm_to_vmem [thread:$0]  %s246, 4096, %s248, %s236, 256, 256, 16
        $region24: #{tpu_custom_call.1} parent=15 // pred_fallthru
          _
        // Predicated region
        $region25: #{tpu_custom_call.1} parent=15 // pred_check
          %p254 = pneg %p104
        $region26: #{tpu_custom_call.1} parent=15 // pred_check_branch
          %256 = sbr.rel (%p254) target = $region28
        $region27: #{tpu_custom_call.1} parent=15 // pred_region
          %s257 = sand.u32 %s28, 1
          %s258 = scalar_lea.sflag [#allocation8], %s257
          %s259 = sand.u32 %s94, 1
          %s260 = smul.addr %s259, 4
          %s261 = scalar_lea.vmem [#allocation9], %s260
          %s262 = sld [smem:[#allocation3 + %s28]]
          %s264 = ssub.s32 64, 64
          %265 = vsyncadd %s258, %s264
          %s266 = smul.addr %s262, 4
          %s267 = smul.addr %s266, 16
          %s268 = scalar_lea.hbm %s3, %s267
          %s270 = sshll.u32 %s261, 4
          %s271 = int_to_ptr.vmem [resolvable:$true] %s270
          %273 = dma.hbm_to_vmem [thread:$0]  %s268, 64, %s271, %s258
        $region28: #{tpu_custom_call.1} parent=15 // pred_fallthru
          _
        // Predicated region
        $region29: #{tpu_custom_call.1} parent=15 // pred_check
          %p274 = pneg %p132
        $region30: #{tpu_custom_call.1} parent=15 // pred_check_branch
          %276 = sbr.rel (%p274) target = $region32
        $region31: #{tpu_custom_call.1} parent=15 // pred_region
          %s277 = sand.u32 %s122, 1
          %s278 = scalar_lea.sflag [#allocation11], %s277
          %s279 = sand.u32 %s122, 1
          %s280 = smul.addr %s279, 256
          %s281 = scalar_lea.vmem [#allocation10], %s280
          %s282 = sld [smem:[#allocation3 + %s28]]
          %s284 = ssub.s32 4096, 4096
          %285 = vsyncadd %s278, %s284
          %s286 = smul.addr %s282, 64
          %s287 = smul.addr %s286, 64
          %s288 = scalar_lea.hbm %s4, %s287
          %s289 = sshll.u32 %s281, 4
          %s290 = int_to_ptr.vmem [resolvable:$true] %s289
          %295 = dma.hbm_to_vmem [thread:$0]  %s288, 4096, %s290, %s278, 64, 64, 4
        $region32: #{tpu_custom_call.1} parent=15 // pred_fallthru
          _
        // Predicated region
        $region33: #{tpu_custom_call.1} parent=15 // pred_check
          %p296 = pneg %p160
        $region34: #{tpu_custom_call.1} parent=15 // pred_check_branch
          %298 = sbr.rel (%p296) target = $region36
        $region35: #{tpu_custom_call.1} parent=15 // pred_region
          %s299 = sld [smem:[#allocation3 + %s28]]
          %p300 = scmp.lt.s32.totalorder %s299, 3
          %s301 = scalar_select %p300, %s299, 3
          %s302 = scalar_lea.vmem %s5, %s301
          %s303 = sld [smem:[#allocation3 + %s28]]
        $region36: #{tpu_custom_call.1} parent=15 // pred_fallthru
          _
      $region16: #{tpu_custom_call.1} parent=5 // pred_fallthru
        _
      %p304 = scmp.le.s32.totalorder 1, %s28
      %p305 = scmp.lt.s32.totalorder %s28, 4
      %p306 = pnand %p304, %p305
      %p307 = pneg %p306
      // Predicated region
      $region37: #{tpu_custom_call.1} parent=5 // pred_check
        _
      $region38: #{tpu_custom_call.1} parent=5 // pred_check_branch
        %309 = sbr.rel (%p306) target = $region40
      $region39: #{tpu_custom_call.1} parent=5 // pred_region
        %s310 = ssub.s32 %s28, 1
        %s311 = sand.u32 %s41, 1
        %s312 = scalar_lea.sflag [#allocation5], %s311
        %s313 = sand.u32 %s41, 1
        %s314 = smul.addr %s313, 68
        %s315 = scalar_lea.vmem [#allocation4], %s314
        // Predicated region
        $region41: #{tpu_custom_call.1} parent=39 // pred_check
          %p316 = pneg %p54
        $region42: #{tpu_custom_call.1} parent=39 // pred_check_branch
          %318 = sbr.rel (%p316) target = $region44
        $region43: #{tpu_custom_call.1} parent=39 // pred_region
          %319 = dma.done %s312, 1088
        $region44: #{tpu_custom_call.1} parent=39 // pred_fallthru
          _
        %s320 = sand.u32 %s33, 1
        %s321 = scalar_lea.sflag [#allocation8], %s320
        %s322 = sand.u32 %s69, 1
        %s323 = smul.addr %s322, 256
        %s324 = scalar_lea.vmem [#allocation7], %s323
        // Predicated region
        $region45: #{tpu_custom_call.1} parent=39 // pred_check
          %p325 = pneg %p82
        $region46: #{tpu_custom_call.1} parent=39 // pred_check_branch
          %327 = sbr.rel (%p325) target = $region48
        $region47: #{tpu_custom_call.1} parent=39 // pred_region
          %328 = dma.done %s321, 4096
        $region48: #{tpu_custom_call.1} parent=39 // pred_fallthru
          _
        %s329 = sand.u32 %s33, 1
        %s330 = scalar_lea.sflag [#allocation8], %s329
        %s331 = sand.u32 %s97, 1
        %s332 = smul.addr %s331, 4
        %s333 = scalar_lea.vmem [#allocation9], %s332
        // Predicated region
        $region49: #{tpu_custom_call.1} parent=39 // pred_check
          %p334 = pneg %p110
        $region50: #{tpu_custom_call.1} parent=39 // pred_check_branch
          %336 = sbr.rel (%p334) target = $region52
        $region51: #{tpu_custom_call.1} parent=39 // pred_region
          %337 = dma.done %s330, 64
        $region52: #{tpu_custom_call.1} parent=39 // pred_fallthru
          _
        %s338 = sand.u32 %s125, 1
        %s339 = scalar_lea.sflag [#allocation11], %s338
        %s340 = sand.u32 %s125, 1
        %s341 = smul.addr %s340, 256
        %s342 = scalar_lea.vmem [#allocation10], %s341
        // Predicated region
        $region53: #{tpu_custom_call.1} parent=39 // pred_check
          %p343 = pneg %p138
        $region54: #{tpu_custom_call.1} parent=39 // pred_check_branch
          %345 = sbr.rel (%p343) target = $region56
        $region55: #{tpu_custom_call.1} parent=39 // pred_region
          %346 = dma.done %s339, 4096
        $region56: #{tpu_custom_call.1} parent=39 // pred_fallthru
          _
        %s347 = sand.u32 %s41, 1
        %s348 = scalar_lea.sflag [#allocation5], %s347
        %s349 = sand.u32 %s41, 1
        %s350 = smul.addr %s349, 68
        %s351 = scalar_lea.vmem [#allocation4], %s350
        %p352 = pneg %p54
        %p353 = pneg %p51
        %s354 = sand.u32 %s33, 1
        %s355 = scalar_lea.sflag [#allocation8], %s354
        %s356 = sand.u32 %s69, 1
        %s357 = smul.addr %s356, 256
        %s358 = scalar_lea.vmem [#allocation7], %s357
        %p359 = pneg %p82
        %p360 = pneg %p79
        %s361 = sand.u32 %s33, 1
        %s362 = scalar_lea.sflag [#allocation8], %s361
        %s363 = sand.u32 %s97, 1
        %s364 = smul.addr %s363, 4
        %s365 = scalar_lea.vmem [#allocation9], %s364
        %p366 = pneg %p110
        %p367 = pneg %p107
        %s368 = sand.u32 %s125, 1
        %s369 = scalar_lea.sflag [#allocation11], %s368
        %s370 = sand.u32 %s125, 1
        %s371 = smul.addr %s370, 256
        %s372 = scalar_lea.vmem [#allocation10], %s371
        %p373 = pneg %p138
        %p374 = pneg %p135
        %s375 = sld [smem:[#allocation3 + %s33]]
        %p376 = scmp.lt.s32.totalorder %s375, 3
        %s377 = scalar_select %p376, %s375, 3
        %s378 = scalar_lea.vmem %s5, %s377
        %p379 = pneg %p166
        %p380 = pneg %p163
        %p381 = pneg %p192
        %p382 = pneg %p189
        %s383 = sand.u32 %s179, 1
        %s384 = scalar_lea.sflag [#allocation6], %s383
        %s385 = sand.u32 %s179, 1
        %s386 = smul.addr %s385, 136
        %s387 = scalar_lea.vmem [#allocation12], %s386
        %s388 = smul.u32 17, %s33
        %s389 = sld [smem:[#allocation3 + %s33]]
        %s390 = sld [smem:[#allocation3 + %s33]]
        %s391 = sld [smem:[#allocation3 + %s33]]
        %s392 = sld [smem:[#allocation3 + %s33]]
        %p393 = scmp.lt.s32.totalorder %s392, 3
        %s394 = scalar_select %p393, %s392, 3
        %s395 = scalar_lea.vmem %s5, %s394
        %s396 = sld [smem:[#allocation3 + %s33]]
        %s397 = smul.u32 17, %s33
        %v399 = vld [vmem:[%s315] sm:$0xf]
        %v400 = vld [vmem:[%s315 + $0x4] sm:$0xf]
        %v401 = vld [vmem:[%s315 + $0x8] sm:$0xf]
        %v402 = vld [vmem:[%s315 + $0xc] sm:$0xf]
        %v403 = vld [vmem:[%s315 + $0x10] sm:$0xf]
        %v404 = vld [vmem:[%s315 + $0x14] sm:$0xf]
        %v405 = vld [vmem:[%s315 + $0x18] sm:$0xf]
        %v406 = vld [vmem:[%s315 + $0x1c] sm:$0xf]
        %v407 = vld [vmem:[%s315 + $0x20] sm:$0xf]
        %v408 = vld [vmem:[%s315 + $0x24] sm:$0xf]
        %v409 = vld [vmem:[%s315 + $0x28] sm:$0xf]
        %v410 = vld [vmem:[%s315 + $0x2c] sm:$0xf]
        %v411 = vld [vmem:[%s315 + $0x30] sm:$0xf]
        %v412 = vld [vmem:[%s315 + $0x34] sm:$0xf]
        %v413 = vld [vmem:[%s315 + $0x38] sm:$0xf]
        %v414 = vld [vmem:[%s315 + $0x3c] sm:$0xf]
        %v415 = vld [vmem:[%s315 + $0x40] sm:$0xf]
        %v416 = vld [vmem:[%s324] sm:$0xff]
        %v417 = vld [vmem:[%s324 + $0x8] sm:$0xff]
        %v418 = vld [vmem:[%s324 + $0x10] sm:$0xff]
        %v419 = vld [vmem:[%s324 + $0x18] sm:$0xff]
        %v420 = vld [vmem:[%s324 + $0x20] sm:$0xff]
        %v421 = vld [vmem:[%s324 + $0x28] sm:$0xff]
        %v422 = vld [vmem:[%s324 + $0x30] sm:$0xff]
        %v423 = vld [vmem:[%s324 + $0x38] sm:$0xff]
        %v424 = vld [vmem:[%s324 + $0x40] sm:$0xff]
        %v425 = vld [vmem:[%s324 + $0x48] sm:$0xff]
        %v426 = vld [vmem:[%s324 + $0x50] sm:$0xff]
        %v427 = vld [vmem:[%s324 + $0x58] sm:$0xff]
        %v428 = vld [vmem:[%s324 + $0x60] sm:$0xff]
        %v429 = vld [vmem:[%s324 + $0x68] sm:$0xff]
        %v430 = vld [vmem:[%s324 + $0x70] sm:$0xff]
        %v431 = vld [vmem:[%s324 + $0x78] sm:$0xff]
        %v432 = vld [vmem:[%s324 + $0x80] sm:$0xff]
        %v433 = vld [vmem:[%s324 + $0x88] sm:$0xff]
        %v434 = vld [vmem:[%s324 + $0x90] sm:$0xff]
        %v435 = vld [vmem:[%s324 + $0x98] sm:$0xff]
        %v436 = vld [vmem:[%s324 + $0xa0] sm:$0xff]
        %v437 = vld [vmem:[%s324 + $0xa8] sm:$0xff]
        %v438 = vld [vmem:[%s324 + $0xb0] sm:$0xff]
        %v439 = vld [vmem:[%s324 + $0xb8] sm:$0xff]
        %v440 = vld [vmem:[%s324 + $0xc0] sm:$0xff]
        %v441 = vld [vmem:[%s324 + $0xc8] sm:$0xff]
        %v442 = vld [vmem:[%s324 + $0xd0] sm:$0xff]
        %v443 = vld [vmem:[%s324 + $0xd8] sm:$0xff]
        %v444 = vld [vmem:[%s324 + $0xe0] sm:$0xff]
        %v445 = vld [vmem:[%s324 + $0xe8] sm:$0xff]
        %v446 = vld [vmem:[%s324 + $0xf0] sm:$0xff]
        %v447 = vld [vmem:[%s324 + $0xf8] sm:$0xff]
        %v448 = vld [vmem:[%s333] sm:$0xf]
        %v450 = vlaneseq
        %v451 = vshrl.u32 %v450, 7
        %v452 = vsub.s32 0, %v451
        %v453 = vrot.slane %v448, %v452
        %v454 = vlaneseq
        %v455 = vshrl.u32 %v454, 7
        %v456 = vsub.s32 1, %v455
        %v457 = vrot.slane %v448, %v456
        %v458 = vlaneseq
        %v459 = vshrl.u32 %v458, 7
        %v460 = vsub.s32 2, %v459
        %v461 = vrot.slane %v448, %v460
        %v462 = vlaneseq
        %v463 = vshrl.u32 %v462, 7
        %v464 = vsub.s32 3, %v463
        %v465 = vrot.slane %v448, %v464
        %v487 = vunpack.c.l.b16 %v399
        %v488 = vunpack.c.l.b16 %v400
        %v489 = vunpack.c.l.b16 %v401
        %v490 = vunpack.c.l.b16 %v402
        %v491 = vunpack.c.l.b16 %v403
        %v492 = vunpack.c.l.b16 %v404
        %v493 = vunpack.c.l.b16 %v405
        %v494 = vunpack.c.l.b16 %v406
        %v495 = vunpack.c.l.b16 %v407
        %v496 = vunpack.c.l.b16 %v408
        %v497 = vunpack.c.l.b16 %v409
        %v498 = vunpack.c.l.b16 %v410
        %v499 = vunpack.c.l.b16 %v411
        %v500 = vunpack.c.l.b16 %v412
        %v501 = vunpack.c.l.b16 %v413
        %v502 = vunpack.c.l.b16 %v414
        %v503 = vunpack.c.l.b16 %v415
        %v504 = vpack.c.b16 %v488, %v487
        %v505 = vpack.c.b16 %v490, %v489
        %v506 = vpack.c.b16 %v492, %v491
        %v507 = vpack.c.b16 %v494, %v493
        %v508 = vpack.c.b16 %v496, %v495
        %v509 = vpack.c.b16 %v498, %v497
        %v510 = vpack.c.b16 %v500, %v499
        %v511 = vpack.c.b16 %v502, %v501
        %v512 = vpack.c.b16 %v503, %v503
        %v554 = vunpack.c.l.b16 %v416
        %v555 = vunpack.c.h.b16 %v416
        %v556 = vunpack.c.l.b16 %v417
        %v557 = vunpack.c.h.b16 %v417
        %v558 = vunpack.c.l.b16 %v418
        %v559 = vunpack.c.h.b16 %v418
        %v560 = vunpack.c.l.b16 %v419
        %v561 = vunpack.c.h.b16 %v419
        %v562 = vunpack.c.l.b16 %v420
        %v563 = vunpack.c.h.b16 %v420
        %v564 = vunpack.c.l.b16 %v421
        %v565 = vunpack.c.h.b16 %v421
        %v566 = vunpack.c.l.b16 %v422
        %v567 = vunpack.c.h.b16 %v422
        %v568 = vunpack.c.l.b16 %v423
        %v569 = vunpack.c.h.b16 %v423
        %v570 = vunpack.c.l.b16 %v424
        %v571 = vunpack.c.h.b16 %v424
        %v572 = vunpack.c.l.b16 %v425
        %v573 = vunpack.c.h.b16 %v425
        %v574 = vunpack.c.l.b16 %v426
        %v575 = vunpack.c.h.b16 %v426
        %v576 = vunpack.c.l.b16 %v427
        %v577 = vunpack.c.h.b16 %v427
        %v578 = vunpack.c.l.b16 %v428
        %v579 = vunpack.c.h.b16 %v428
        %v580 = vunpack.c.l.b16 %v429
        %v581 = vunpack.c.h.b16 %v429
        %v582 = vunpack.c.l.b16 %v430
        %v583 = vunpack.c.h.b16 %v430
        %v584 = vunpack.c.l.b16 %v431
        %v585 = vunpack.c.h.b16 %v431
        %v586 = vunpack.c.l.b16 %v432
        %v587 = vunpack.c.h.b16 %v432
        %v588 = vunpack.c.l.b16 %v433
        %v589 = vunpack.c.h.b16 %v433
        %v590 = vunpack.c.l.b16 %v434
        %v591 = vunpack.c.h.b16 %v434
        %v592 = vunpack.c.l.b16 %v435
        %v593 = vunpack.c.h.b16 %v435
        %v594 = vunpack.c.l.b16 %v436
        %v595 = vunpack.c.h.b16 %v436
        %v596 = vunpack.c.l.b16 %v437
        %v597 = vunpack.c.h.b16 %v437
        %v598 = vunpack.c.l.b16 %v438
        %v599 = vunpack.c.h.b16 %v438
        %v600 = vunpack.c.l.b16 %v439
        %v601 = vunpack.c.h.b16 %v439
        %v602 = vunpack.c.l.b16 %v440
        %v603 = vunpack.c.h.b16 %v440
        %v604 = vunpack.c.l.b16 %v441
        %v605 = vunpack.c.h.b16 %v441
        %v606 = vunpack.c.l.b16 %v442
        %v607 = vunpack.c.h.b16 %v442
        %v608 = vunpack.c.l.b16 %v443
        %v609 = vunpack.c.h.b16 %v443
        %v610 = vunpack.c.l.b16 %v444
        %v611 = vunpack.c.h.b16 %v444
        %v612 = vunpack.c.l.b16 %v445
        %v613 = vunpack.c.h.b16 %v445
        %v614 = vunpack.c.l.b16 %v446
        %v615 = vunpack.c.h.b16 %v446
        %v616 = vunpack.c.l.b16 %v447
        %v617 = vunpack.c.h.b16 %v447
        %v618 = vpack.c.b16 %v558, %v554
        %v619 = vpack.c.b16 %v559, %v555
        %v620 = vpack.c.b16 %v560, %v556
        %v621 = vpack.c.b16 %v561, %v557
        %v622 = vpack.c.b16 %v566, %v562
        %v623 = vpack.c.b16 %v567, %v563
        %v624 = vpack.c.b16 %v568, %v564
        %v625 = vpack.c.b16 %v569, %v565
        %v626 = vpack.c.b16 %v574, %v570
        %v627 = vpack.c.b16 %v575, %v571
        %v628 = vpack.c.b16 %v576, %v572
        %v629 = vpack.c.b16 %v577, %v573
        %v630 = vpack.c.b16 %v582, %v578
        %v631 = vpack.c.b16 %v583, %v579
        %v632 = vpack.c.b16 %v584, %v580
        %v633 = vpack.c.b16 %v585, %v581
        %v634 = vpack.c.b16 %v590, %v586
        %v635 = vpack.c.b16 %v591, %v587
        %v636 = vpack.c.b16 %v592, %v588
        %v637 = vpack.c.b16 %v593, %v589
        %v638 = vpack.c.b16 %v598, %v594
        %v639 = vpack.c.b16 %v599, %v595
        %v640 = vpack.c.b16 %v600, %v596
        %v641 = vpack.c.b16 %v601, %v597
        %v642 = vpack.c.b16 %v606, %v602
        %v643 = vpack.c.b16 %v607, %v603
        %v644 = vpack.c.b16 %v608, %v604
        %v645 = vpack.c.b16 %v609, %v605
        %v646 = vpack.c.b16 %v614, %v610
        %v647 = vpack.c.b16 %v615, %v611
        %v648 = vpack.c.b16 %v616, %v612
        %v649 = vpack.c.b16 %v617, %v613
        %682 = vmatprep.subr.bf16.mxu0 %v619
        %683 = vmatpush1.bf16.msra.mxu0 %v618
        %684 = vmatprep.subr.bf16.mxu0 %v623
        %685 = vmatpush1.bf16.msra.mxu0 %v622
        %686 = vmatprep.subr.bf16.mxu0 %v627
        %687 = vmatpush1.bf16.msra.mxu0 %v626
        %688 = vmatprep.subr.bf16.mxu0 %v631
        %689 = vmatpush1.bf16.msra.mxu0 %v630
        %690 = vmatprep.subr.bf16.mxu0 %v635
        %691 = vmatpush1.bf16.msra.mxu0 %v634
        %692 = vmatprep.subr.bf16.mxu0 %v639
        %693 = vmatpush1.bf16.msra.mxu0 %v638
        %694 = vmatprep.subr.bf16.mxu0 %v643
        %695 = vmatpush1.bf16.msra.mxu0 %v642
        %696 = vmatprep.subr.bf16.mxu0 %v647
        %697 = vmatpush1.bf16.msra.mxu0 %v646
        %698 = vmatprep.subr.bf16.mxu0 0
        %699 = vmatpush1.bf16.msra.mxu0 0
        %700 = vmatprep.subr.bf16.mxu0 0
        %701 = vmatpush1.bf16.msra.mxu0 0
        %702 = vmatprep.subr.bf16.mxu0 0
        %703 = vmatpush1.bf16.msra.mxu0 0
        %704 = vmatprep.subr.bf16.mxu0 0
        %705 = vmatpush1.bf16.msra.mxu0 0
        %706 = vmatprep.subr.bf16.mxu0 0
        %707 = vmatpush1.bf16.msra.mxu0 0
        %708 = vmatprep.subr.bf16.mxu0 0
        %709 = vmatpush1.bf16.msra.mxu0 0
        %710 = vmatprep.subr.bf16.mxu0 0
        %711 = vmatpush1.bf16.msra.mxu0 0
        %712 = vmatprep.subr.bf16.mxu0 0
        %713 = vmatpush1.bf16.msra.mxu0 0
        %714 = vmatprep.mubr.bf16.mxu0 0
        %715 = vmatmul.mubr.bf16.gmra.mrb[0].mxu0 %v504
        %v716 = vpop.f32.mrb[0].mxu0
        %v717 = vadd.f32 %v453, %v716
        %v718 = vpop.f32.mrb[0].mxu0
        %v719 = vadd.f32 %v457, %v718
        %v720 = vpop.f32.mrb[0].mxu0
        %v721 = vadd.f32 %v453, %v720
        %v722 = vpop.f32.mrb[0].mxu0
        %v723 = vadd.f32 %v457, %v722
        %724 = vmatprep.mubr.bf16.mxu0 0
        %725 = vmatmul.mubr.bf16.gmra.mrb[0].mxu0 %v505
        %v726 = vpop.f32.mrb[0].mxu0
        %v727 = vadd.f32 %v453, %v726
        %v728 = vpop.f32.mrb[0].mxu0
        %v729 = vadd.f32 %v457, %v728
        %v730 = vpop.f32.mrb[0].mxu0
        %v731 = vadd.f32 %v453, %v730
        %v732 = vpop.f32.mrb[0].mxu0
        %v733 = vadd.f32 %v457, %v732
        %734 = vmatprep.mubr.bf16.mxu0 0
        %735 = vmatmul.mubr.bf16.gmra.mrb[0].mxu0 %v506
        %v736 = vpop.f32.mrb[0].mxu0
        %v737 = vadd.f32 %v453, %v736
        %v738 = vpop.f32.mrb[0].mxu0
        %v739 = vadd.f32 %v457, %v738
        %v740 = vpop.f32.mrb[0].mxu0
        %v741 = vadd.f32 %v453, %v740
        %v742 = vpop.f32.mrb[0].mxu0
        %v743 = vadd.f32 %v457, %v742
        %744 = vmatprep.mubr.bf16.mxu0 0
        %745 = vmatmul.mubr.bf16.gmra.mrb[0].mxu0 %v507
        %v746 = vpop.f32.mrb[0].mxu0
        %v747 = vadd.f32 %v453, %v746
        %v748 = vpop.f32.mrb[0].mxu0
        %v749 = vadd.f32 %v457, %v748
        %v750 = vpop.f32.mrb[0].mxu0
        %v751 = vadd.f32 %v453, %v750
        %v752 = vpop.f32.mrb[0].mxu0
        %v753 = vadd.f32 %v457, %v752
        %754 = vmatprep.mubr.bf16.mxu0 0
        %755 = vmatmul.mubr.bf16.gmra.mrb[0].mxu0 %v508
        %v756 = vpop.f32.mrb[0].mxu0
        %v757 = vadd.f32 %v453, %v756
        %v758 = vpop.f32.mrb[0].mxu0
        %v759 = vadd.f32 %v457, %v758
        %v760 = vpop.f32.mrb[0].mxu0
        %v761 = vadd.f32 %v453, %v760
        %v762 = vpop.f32.mrb[0].mxu0
        %v763 = vadd.f32 %v457, %v762
        %764 = vmatprep.mubr.bf16.mxu0 0
        %765 = vmatmul.mubr.bf16.gmra.mrb[0].mxu0 %v509
        %v766 = vpop.f32.mrb[0].mxu0
        %v767 = vadd.f32 %v453, %v766
        %v768 = vpop.f32.mrb[0].mxu0
        %v769 = vadd.f32 %v457, %v768
        %v770 = vpop.f32.mrb[0].mxu0
        %v771 = vadd.f32 %v453, %v770
        %v772 = vpop.f32.mrb[0].mxu0
        %v773 = vadd.f32 %v457, %v772
        %774 = vmatprep.mubr.bf16.mxu0 0
        %775 = vmatmul.mubr.bf16.gmra.mrb[0].mxu0 %v510
        %v776 = vpop.f32.mrb[0].mxu0
        %v777 = vadd.f32 %v453, %v776
        %v778 = vpop.f32.mrb[0].mxu0
        %v779 = vadd.f32 %v457, %v778
        %v780 = vpop.f32.mrb[0].mxu0
        %v781 = vadd.f32 %v453, %v780
        %v782 = vpop.f32.mrb[0].mxu0
        %v783 = vadd.f32 %v457, %v782
        %784 = vmatprep.mubr.bf16.mxu0 0
        %785 = vmatmul.mubr.bf16.gmra.mrb[0].mxu0 %v511
        %v786 = vpop.f32.mrb[0].mxu0
        %v787 = vadd.f32 %v453, %v786
        %v788 = vpop.f32.mrb[0].mxu0
        %v789 = vadd.f32 %v457, %v788
        %v790 = vpop.f32.mrb[0].mxu0
        %v791 = vadd.f32 %v453, %v790
        %v792 = vpop.f32.mrb[0].mxu0
        %v793 = vadd.f32 %v457, %v792
        %794 = vmatprep.mubr.bf16.mxu0 0
        %795 = vmatmul.mubr.bf16.gmra.mrb[0].mxu0 %v512
        %v796 = vpop.f32.mrb[0].mxu0
        %v797 = vadd.f32 %v453, %v796
        %v798 = vpop.f32.mrb[0].mxu0
        %v799 = vadd.f32 %v457, %v798
        %v800 = vpop.f32.mrb[0].mxu0
        %v801 = vpop.f32.mrb[0].mxu0
        %802 = vdwg.mxu0
        %803 = vmatprep.subr.bf16.mxu0 %v621
        %804 = vmatpush1.bf16.msra.mxu0 %v620
        %805 = vmatprep.subr.bf16.mxu0 %v625
        %806 = vmatpush1.bf16.msra.mxu0 %v624
        %807 = vmatprep.subr.bf16.mxu0 %v629
        %808 = vmatpush1.bf16.msra.mxu0 %v628
        %809 = vmatprep.subr.bf16.mxu0 %v633
        %810 = vmatpush1.bf16.msra.mxu0 %v632
        %811 = vmatprep.subr.bf16.mxu0 %v637
        %812 = vmatpush1.bf16.msra.mxu0 %v636
        %813 = vmatprep.subr.bf16.mxu0 %v641
        %814 = vmatpush1.bf16.msra.mxu0 %v640
        %815 = vmatprep.subr.bf16.mxu0 %v645
        %816 = vmatpush1.bf16.msra.mxu0 %v644
        %817 = vmatprep.subr.bf16.mxu0 %v649
        %818 = vmatpush1.bf16.msra.mxu0 %v648
        %819 = vmatprep.subr.bf16.mxu0 0
        %820 = vmatpush1.bf16.msra.mxu0 0
        %821 = vmatprep.subr.bf16.mxu0 0
        %822 = vmatpush1.bf16.msra.mxu0 0
        %823 = vmatprep.subr.bf16.mxu0 0
        %824 = vmatpush1.bf16.msra.mxu0 0
        %825 = vmatprep.subr.bf16.mxu0 0
        %826 = vmatpush1.bf16.msra.mxu0 0
        %827 = vmatprep.subr.bf16.mxu0 0
        %828 = vmatpush1.bf16.msra.mxu0 0
        %829 = vmatprep.subr.bf16.mxu0 0
        %830 = vmatpush1.bf16.msra.mxu0 0
        %831 = vmatprep.subr.bf16.mxu0 0
        %832 = vmatpush1.bf16.msra.mxu0 0
        %833 = vmatprep.subr.bf16.mxu0 0
        %834 = vmatpush1.bf16.msra.mxu0 0
        %835 = vmatprep.mubr.bf16.mxu0 0
        %836 = vmatmul.mubr.bf16.gmra.mrb[0].mxu0 %v504
        %v837 = vpop.f32.mrb[0].mxu0
        %v838 = vadd.f32 %v461, %v837
        %v839 = vpop.f32.mrb[0].mxu0
        %v840 = vadd.f32 %v465, %v839
        %v841 = vpop.f32.mrb[0].mxu0
        %v842 = vadd.f32 %v461, %v841
        %v843 = vpop.f32.mrb[0].mxu0
        %v844 = vadd.f32 %v465, %v843
        %845 = vmatprep.mubr.bf16.mxu0 0
        %846 = vmatmul.mubr.bf16.gmra.mrb[0].mxu0 %v505
        %v847 = vpop.f32.mrb[0].mxu0
        %v848 = vadd.f32 %v461, %v847
        %v849 = vpop.f32.mrb[0].mxu0
        %v850 = vadd.f32 %v465, %v849
        %v851 = vpop.f32.mrb[0].mxu0
        %v852 = vadd.f32 %v461, %v851
        %v853 = vpop.f32.mrb[0].mxu0
        %v854 = vadd.f32 %v465, %v853
        %855 = vmatprep.mubr.bf16.mxu0 0
        %856 = vmatmul.mubr.bf16.gmra.mrb[0].mxu0 %v506
        %v857 = vpop.f32.mrb[0].mxu0
        %v858 = vadd.f32 %v461, %v857
        %v859 = vpop.f32.mrb[0].mxu0
        %v860 = vadd.f32 %v465, %v859
        %v861 = vpop.f32.mrb[0].mxu0
        %v862 = vadd.f32 %v461, %v861
        %v863 = vpop.f32.mrb[0].mxu0
        %v864 = vadd.f32 %v465, %v863
        %865 = vmatprep.mubr.bf16.mxu0 0
        %866 = vmatmul.mubr.bf16.gmra.mrb[0].mxu0 %v507
        %v867 = vpop.f32.mrb[0].mxu0
        %v868 = vadd.f32 %v461, %v867
        %v869 = vpop.f32.mrb[0].mxu0
        %v870 = vadd.f32 %v465, %v869
        %v871 = vpop.f32.mrb[0].mxu0
        %v872 = vadd.f32 %v461, %v871
        %v873 = vpop.f32.mrb[0].mxu0
        %v874 = vadd.f32 %v465, %v873
        %875 = vmatprep.mubr.bf16.mxu0 0
        %876 = vmatmul.mubr.bf16.gmra.mrb[0].mxu0 %v508
        %v877 = vpop.f32.mrb[0].mxu0
        %v878 = vadd.f32 %v461, %v877
        %v879 = vpop.f32.mrb[0].mxu0
        %v880 = vadd.f32 %v465, %v879
        %v881 = vpop.f32.mrb[0].mxu0
        %v882 = vadd.f32 %v461, %v881
        %v883 = vpop.f32.mrb[0].mxu0
        %v884 = vadd.f32 %v465, %v883
        %885 = vmatprep.mubr.bf16.mxu0 0
        %886 = vmatmul.mubr.bf16.gmra.mrb[0].mxu0 %v509
        %v887 = vpop.f32.mrb[0].mxu0
        %v888 = vadd.f32 %v461, %v887
        %v889 = vpop.f32.mrb[0].mxu0
        %v890 = vadd.f32 %v465, %v889
        %v891 = vpop.f32.mrb[0].mxu0
        %v892 = vadd.f32 %v461, %v891
        %v893 = vpop.f32.mrb[0].mxu0
        %v894 = vadd.f32 %v465, %v893
        %895 = vmatprep.mubr.bf16.mxu0 0
        %896 = vmatmul.mubr.bf16.gmra.mrb[0].mxu0 %v510
        %v897 = vpop.f32.mrb[0].mxu0
        %v898 = vadd.f32 %v461, %v897
        %v899 = vpop.f32.mrb[0].mxu0
        %v900 = vadd.f32 %v465, %v899
        %v901 = vpop.f32.mrb[0].mxu0
        %v902 = vadd.f32 %v461, %v901
        %v903 = vpop.f32.mrb[0].mxu0
        %v904 = vadd.f32 %v465, %v903
        %905 = vmatprep.mubr.bf16.mxu0 0
        %906 = vmatmul.mubr.bf16.gmra.mrb[0].mxu0 %v511
        %v907 = vpop.f32.mrb[0].mxu0
        %v908 = vadd.f32 %v461, %v907
        %v909 = vpop.f32.mrb[0].mxu0
        %v910 = vadd.f32 %v465, %v909
        %v911 = vpop.f32.mrb[0].mxu0
        %v912 = vadd.f32 %v461, %v911
        %v913 = vpop.f32.mrb[0].mxu0
        %v914 = vadd.f32 %v465, %v913
        %915 = vmatprep.mubr.bf16.mxu0 0
        %916 = vmatmul.mubr.bf16.gmra.mrb[0].mxu0 %v512
        %v917 = vpop.f32.mrb[0].mxu0
        %v918 = vadd.f32 %v461, %v917
        %v919 = vpop.f32.mrb[0].mxu0
        %v920 = vadd.f32 %v465, %v919
        %v921 = vpop.f32.mrb[0].mxu0
        %v922 = vpop.f32.mrb[0].mxu0
        %923 = vdwg.mxu0
        %v924 = vmul.f32 %v717, %v717
        %v925 = vmul.f32 %v719, %v719
        %v926 = vmul.f32 %v838, %v838
        %v927 = vmul.f32 %v840, %v840
        %v928 = vmul.f32 %v721, %v721
        %v929 = vmul.f32 %v723, %v723
        %v930 = vmul.f32 %v842, %v842
        %v931 = vmul.f32 %v844, %v844
        %v932 = vmul.f32 %v727, %v727
        %v933 = vmul.f32 %v729, %v729
        %v934 = vmul.f32 %v848, %v848
        %v935 = vmul.f32 %v850, %v850
        %v936 = vmul.f32 %v731, %v731
        %v937 = vmul.f32 %v733, %v733
        %v938 = vmul.f32 %v852, %v852
        %v939 = vmul.f32 %v854, %v854
        %v940 = vmul.f32 %v737, %v737
        %v941 = vmul.f32 %v739, %v739
        %v942 = vmul.f32 %v858, %v858
        %v943 = vmul.f32 %v860, %v860
        %v944 = vmul.f32 %v741, %v741
        %v945 = vmul.f32 %v743, %v743
        %v946 = vmul.f32 %v862, %v862
        %v947 = vmul.f32 %v864, %v864
        %v948 = vmul.f32 %v747, %v747
        %v949 = vmul.f32 %v749, %v749
        %v950 = vmul.f32 %v868, %v868
        %v951 = vmul.f32 %v870, %v870
        %v952 = vmul.f32 %v751, %v751
        %v953 = vmul.f32 %v753, %v753
        %v954 = vmul.f32 %v872, %v872
        %v955 = vmul.f32 %v874, %v874
        %v956 = vmul.f32 %v757, %v757
        %v957 = vmul.f32 %v759, %v759
        %v958 = vmul.f32 %v878, %v878
        %v959 = vmul.f32 %v880, %v880
        %v960 = vmul.f32 %v761, %v761
        %v961 = vmul.f32 %v763, %v763
        %v962 = vmul.f32 %v882, %v882
        %v963 = vmul.f32 %v884, %v884
        %v964 = vmul.f32 %v767, %v767
        %v965 = vmul.f32 %v769, %v769
        %v966 = vmul.f32 %v888, %v888
        %v967 = vmul.f32 %v890, %v890
        %v968 = vmul.f32 %v771, %v771
        %v969 = vmul.f32 %v773, %v773
        %v970 = vmul.f32 %v892, %v892
        %v971 = vmul.f32 %v894, %v894
        %v972 = vmul.f32 %v777, %v777
        %v973 = vmul.f32 %v779, %v779
        %v974 = vmul.f32 %v898, %v898
        %v975 = vmul.f32 %v900, %v900
        %v976 = vmul.f32 %v781, %v781
        %v977 = vmul.f32 %v783, %v783
        %v978 = vmul.f32 %v902, %v902
        %v979 = vmul.f32 %v904, %v904
        %v980 = vmul.f32 %v787, %v787
        %v981 = vmul.f32 %v789, %v789
        %v982 = vmul.f32 %v908, %v908
        %v983 = vmul.f32 %v910, %v910
        %v984 = vmul.f32 %v791, %v791
        %v985 = vmul.f32 %v793, %v793
        %v986 = vmul.f32 %v912, %v912
        %v987 = vmul.f32 %v914, %v914
        %v988 = vmul.f32 %v797, %v797
        %v989 = vmul.f32 %v799, %v799
        %v990 = vmul.f32 %v918, %v918
        %v991 = vmul.f32 %v920, %v920
        %v992 = vmul.f32 %v717, %v924
        %v993 = vmul.f32 %v719, %v925
        %v994 = vmul.f32 %v838, %v926
        %v995 = vmul.f32 %v840, %v927
        %v996 = vmul.f32 %v721, %v928
        %v997 = vmul.f32 %v723, %v929
        %v998 = vmul.f32 %v842, %v930
        %v999 = vmul.f32 %v844, %v931
        %v1000 = vmul.f32 %v727, %v932
        %v1001 = vmul.f32 %v729, %v933
        %v1002 = vmul.f32 %v848, %v934
        %v1003 = vmul.f32 %v850, %v935
        %v1004 = vmul.f32 %v731, %v936
        %v1005 = vmul.f32 %v733, %v937
        %v1006 = vmul.f32 %v852, %v938
        %v1007 = vmul.f32 %v854, %v939
        %v1008 = vmul.f32 %v737, %v940
        %v1009 = vmul.f32 %v739, %v941
        %v1010 = vmul.f32 %v858, %v942
        %v1011 = vmul.f32 %v860, %v943
        %v1012 = vmul.f32 %v741, %v944
        %v1013 = vmul.f32 %v743, %v945
        %v1014 = vmul.f32 %v862, %v946
        %v1015 = vmul.f32 %v864, %v947
        %v1016 = vmul.f32 %v747, %v948
        %v1017 = vmul.f32 %v749, %v949
        %v1018 = vmul.f32 %v868, %v950
        %v1019 = vmul.f32 %v870, %v951
        %v1020 = vmul.f32 %v751, %v952
        %v1021 = vmul.f32 %v753, %v953
        %v1022 = vmul.f32 %v872, %v954
        %v1023 = vmul.f32 %v874, %v955
        %v1024 = vmul.f32 %v757, %v956
        %v1025 = vmul.f32 %v759, %v957
        %v1026 = vmul.f32 %v878, %v958
        %v1027 = vmul.f32 %v880, %v959
        %v1028 = vmul.f32 %v761, %v960
        %v1029 = vmul.f32 %v763, %v961
        %v1030 = vmul.f32 %v882, %v962
        %v1031 = vmul.f32 %v884, %v963
        %v1032 = vmul.f32 %v767, %v964
        %v1033 = vmul.f32 %v769, %v965
        %v1034 = vmul.f32 %v888, %v966
        %v1035 = vmul.f32 %v890, %v967
        %v1036 = vmul.f32 %v771, %v968
        %v1037 = vmul.f32 %v773, %v969
        %v1038 = vmul.f32 %v892, %v970
        %v1039 = vmul.f32 %v894, %v971
        %v1040 = vmul.f32 %v777, %v972
        %v1041 = vmul.f32 %v779, %v973
        %v1042 = vmul.f32 %v898, %v974
        %v1043 = vmul.f32 %v900, %v975
        %v1044 = vmul.f32 %v781, %v976
        %v1045 = vmul.f32 %v783, %v977
        %v1046 = vmul.f32 %v902, %v978
        %v1047 = vmul.f32 %v904, %v979
        %v1048 = vmul.f32 %v787, %v980
        %v1049 = vmul.f32 %v789, %v981
        %v1050 = vmul.f32 %v908, %v982
        %v1051 = vmul.f32 %v910, %v983
        %v1052 = vmul.f32 %v791, %v984
        %v1053 = vmul.f32 %v793, %v985
        %v1054 = vmul.f32 %v912, %v986
        %v1055 = vmul.f32 %v914, %v987
        %v1056 = vmul.f32 %v797, %v988
        %v1057 = vmul.f32 %v799, %v989
        %v1058 = vmul.f32 %v918, %v990
        %v1059 = vmul.f32 %v920, %v991
        %v1060 = vmul.f32 %v992, 0.044715
        %v1061 = vmul.f32 %v993, 0.044715
        %v1062 = vmul.f32 %v994, 0.044715
        %v1063 = vmul.f32 %v995, 0.044715
        %v1064 = vmul.f32 %v996, 0.044715
        %v1065 = vmul.f32 %v997, 0.044715
        %v1066 = vmul.f32 %v998, 0.044715
        %v1067 = vmul.f32 %v999, 0.044715
        %v1068 = vmul.f32 %v1000, 0.044715
        %v1069 = vmul.f32 %v1001, 0.044715
        %v1070 = vmul.f32 %v1002, 0.044715
        %v1071 = vmul.f32 %v1003, 0.044715
        %v1072 = vmul.f32 %v1004, 0.044715
        %v1073 = vmul.f32 %v1005, 0.044715
        %v1074 = vmul.f32 %v1006, 0.044715
        %v1075 = vmul.f32 %v1007, 0.044715
        %v1076 = vmul.f32 %v1008, 0.044715
        %v1077 = vmul.f32 %v1009, 0.044715
        %v1078 = vmul.f32 %v1010, 0.044715
        %v1079 = vmul.f32 %v1011, 0.044715
        %v1080 = vmul.f32 %v1012, 0.044715
        %v1081 = vmul.f32 %v1013, 0.044715
        %v1082 = vmul.f32 %v1014, 0.044715
        %v1083 = vmul.f32 %v1015, 0.044715
        %v1084 = vmul.f32 %v1016, 0.044715
        %v1085 = vmul.f32 %v1017, 0.044715
        %v1086 = vmul.f32 %v1018, 0.044715
        %v1087 = vmul.f32 %v1019, 0.044715
        %v1088 = vmul.f32 %v1020, 0.044715
        %v1089 = vmul.f32 %v1021, 0.044715
        %v1090 = vmul.f32 %v1022, 0.044715
        %v1091 = vmul.f32 %v1023, 0.044715
        %v1092 = vmul.f32 %v1024, 0.044715
        %v1093 = vmul.f32 %v1025, 0.044715
        %v1094 = vmul.f32 %v1026, 0.044715
        %v1095 = vmul.f32 %v1027, 0.044715
        %v1096 = vmul.f32 %v1028, 0.044715
        %v1097 = vmul.f32 %v1029, 0.044715
        %v1098 = vmul.f32 %v1030, 0.044715
        %v1099 = vmul.f32 %v1031, 0.044715
        %v1100 = vmul.f32 %v1032, 0.044715
        %v1101 = vmul.f32 %v1033, 0.044715
        %v1102 = vmul.f32 %v1034, 0.044715
        %v1103 = vmul.f32 %v1035, 0.044715
        %v1104 = vmul.f32 %v1036, 0.044715
        %v1105 = vmul.f32 %v1037, 0.044715
        %v1106 = vmul.f32 %v1038, 0.044715
        %v1107 = vmul.f32 %v1039, 0.044715
        %v1108 = vmul.f32 %v1040, 0.044715
        %v1109 = vmul.f32 %v1041, 0.044715
        %v1110 = vmul.f32 %v1042, 0.044715
        %v1111 = vmul.f32 %v1043, 0.044715
        %v1112 = vmul.f32 %v1044, 0.044715
        %v1113 = vmul.f32 %v1045, 0.044715
        %v1114 = vmul.f32 %v1046, 0.044715
        %v1115 = vmul.f32 %v1047, 0.044715
        %v1116 = vmul.f32 %v1048, 0.044715
        %v1117 = vmul.f32 %v1049, 0.044715
        %v1118 = vmul.f32 %v1050, 0.044715
        %v1119 = vmul.f32 %v1051, 0.044715
        %v1120 = vmul.f32 %v1052, 0.044715
        %v1121 = vmul.f32 %v1053, 0.044715
        %v1122 = vmul.f32 %v1054, 0.044715
        %v1123 = vmul.f32 %v1055, 0.044715
        %v1124 = vmul.f32 %v1056, 0.044715
        %v1125 = vmul.f32 %v1057, 0.044715
        %v1126 = vmul.f32 %v1058, 0.044715
        %v1127 = vmul.f32 %v1059, 0.044715
        %v1128 = vadd.f32 %v717, %v1060
        %v1129 = vadd.f32 %v719, %v1061
        %v1130 = vadd.f32 %v838, %v1062
        %v1131 = vadd.f32 %v840, %v1063
        %v1132 = vadd.f32 %v721, %v1064
        %v1133 = vadd.f32 %v723, %v1065
        %v1134 = vadd.f32 %v842, %v1066
        %v1135 = vadd.f32 %v844, %v1067
        %v1136 = vadd.f32 %v727, %v1068
        %v1137 = vadd.f32 %v729, %v1069
        %v1138 = vadd.f32 %v848, %v1070
        %v1139 = vadd.f32 %v850, %v1071
        %v1140 = vadd.f32 %v731, %v1072
        %v1141 = vadd.f32 %v733, %v1073
        %v1142 = vadd.f32 %v852, %v1074
        %v1143 = vadd.f32 %v854, %v1075
        %v1144 = vadd.f32 %v737, %v1076
        %v1145 = vadd.f32 %v739, %v1077
        %v1146 = vadd.f32 %v858, %v1078
        %v1147 = vadd.f32 %v860, %v1079
        %v1148 = vadd.f32 %v741, %v1080
        %v1149 = vadd.f32 %v743, %v1081
        %v1150 = vadd.f32 %v862, %v1082
        %v1151 = vadd.f32 %v864, %v1083
        %v1152 = vadd.f32 %v747, %v1084
        %v1153 = vadd.f32 %v749, %v1085
        %v1154 = vadd.f32 %v868, %v1086
        %v1155 = vadd.f32 %v870, %v1087
        %v1156 = vadd.f32 %v751, %v1088
        %v1157 = vadd.f32 %v753, %v1089
        %v1158 = vadd.f32 %v872, %v1090
        %v1159 = vadd.f32 %v874, %v1091
        %v1160 = vadd.f32 %v757, %v1092
        %v1161 = vadd.f32 %v759, %v1093
        %v1162 = vadd.f32 %v878, %v1094
        %v1163 = vadd.f32 %v880, %v1095
        %v1164 = vadd.f32 %v761, %v1096
        %v1165 = vadd.f32 %v763, %v1097
        %v1166 = vadd.f32 %v882, %v1098
        %v1167 = vadd.f32 %v884, %v1099
        %v1168 = vadd.f32 %v767, %v1100
        %v1169 = vadd.f32 %v769, %v1101
        %v1170 = vadd.f32 %v888, %v1102
        %v1171 = vadd.f32 %v890, %v1103
        %v1172 = vadd.f32 %v771, %v1104
        %v1173 = vadd.f32 %v773, %v1105
        %v1174 = vadd.f32 %v892, %v1106
        %v1175 = vadd.f32 %v894, %v1107
        %v1176 = vadd.f32 %v777, %v1108
        %v1177 = vadd.f32 %v779, %v1109
        %v1178 = vadd.f32 %v898, %v1110
        %v1179 = vadd.f32 %v900, %v1111
        %v1180 = vadd.f32 %v781, %v1112
        %v1181 = vadd.f32 %v783, %v1113
        %v1182 = vadd.f32 %v902, %v1114
        %v1183 = vadd.f32 %v904, %v1115
        %v1184 = vadd.f32 %v787, %v1116
        %v1185 = vadd.f32 %v789, %v1117
        %v1186 = vadd.f32 %v908, %v1118
        %v1187 = vadd.f32 %v910, %v1119
        %v1188 = vadd.f32 %v791, %v1120
        %v1189 = vadd.f32 %v793, %v1121
        %v1190 = vadd.f32 %v912, %v1122
        %v1191 = vadd.f32 %v914, %v1123
        %v1192 = vadd.f32 %v797, %v1124
        %v1193 = vadd.f32 %v799, %v1125
        %v1194 = vadd.f32 %v918, %v1126
        %v1195 = vadd.f32 %v920, %v1127
        %v1196 = vmul.f32 %v1128, 0.7978846
        %v1197 = vmul.f32 %v1129, 0.7978846
        %v1198 = vmul.f32 %v1130, 0.7978846
        %v1199 = vmul.f32 %v1131, 0.7978846
        %v1200 = vmul.f32 %v1132, 0.7978846
        %v1201 = vmul.f32 %v1133, 0.7978846
        %v1202 = vmul.f32 %v1134, 0.7978846
        %v1203 = vmul.f32 %v1135, 0.7978846
        %v1204 = vmul.f32 %v1136, 0.7978846
        %v1205 = vmul.f32 %v1137, 0.7978846
        %v1206 = vmul.f32 %v1138, 0.7978846
        %v1207 = vmul.f32 %v1139, 0.7978846
        %v1208 = vmul.f32 %v1140, 0.7978846
        %v1209 = vmul.f32 %v1141, 0.7978846
        %v1210 = vmul.f32 %v1142, 0.7978846
        %v1211 = vmul.f32 %v1143, 0.7978846
        %v1212 = vmul.f32 %v1144, 0.7978846
        %v1213 = vmul.f32 %v1145, 0.7978846
        %v1214 = vmul.f32 %v1146, 0.7978846
        %v1215 = vmul.f32 %v1147, 0.7978846
        %v1216 = vmul.f32 %v1148, 0.7978846
        %v1217 = vmul.f32 %v1149, 0.7978846
        %v1218 = vmul.f32 %v1150, 0.7978846
        %v1219 = vmul.f32 %v1151, 0.7978846
        %v1220 = vmul.f32 %v1152, 0.7978846
        %v1221 = vmul.f32 %v1153, 0.7978846
        %v1222 = vmul.f32 %v1154, 0.7978846
        %v1223 = vmul.f32 %v1155, 0.7978846
        %v1224 = vmul.f32 %v1156, 0.7978846
        %v1225 = vmul.f32 %v1157, 0.7978846
        %v1226 = vmul.f32 %v1158, 0.7978846
        %v1227 = vmul.f32 %v1159, 0.7978846
        %v1228 = vmul.f32 %v1160, 0.7978846
        %v1229 = vmul.f32 %v1161, 0.7978846
        %v1230 = vmul.f32 %v1162, 0.7978846
        %v1231 = vmul.f32 %v1163, 0.7978846
        %v1232 = vmul.f32 %v1164, 0.7978846
        %v1233 = vmul.f32 %v1165, 0.7978846
        %v1234 = vmul.f32 %v1166, 0.7978846
        %v1235 = vmul.f32 %v1167, 0.7978846
        %v1236 = vmul.f32 %v1168, 0.7978846
        %v1237 = vmul.f32 %v1169, 0.7978846
        %v1238 = vmul.f32 %v1170, 0.7978846
        %v1239 = vmul.f32 %v1171, 0.7978846
        %v1240 = vmul.f32 %v1172, 0.7978846
        %v1241 = vmul.f32 %v1173, 0.7978846
        %v1242 = vmul.f32 %v1174, 0.7978846
        %v1243 = vmul.f32 %v1175, 0.7978846
        %v1244 = vmul.f32 %v1176, 0.7978846
        %v1245 = vmul.f32 %v1177, 0.7978846
        %v1246 = vmul.f32 %v1178, 0.7978846
        %v1247 = vmul.f32 %v1179, 0.7978846
        %v1248 = vmul.f32 %v1180, 0.7978846
        %v1249 = vmul.f32 %v1181, 0.7978846
        %v1250 = vmul.f32 %v1182, 0.7978846
        %v1251 = vmul.f32 %v1183, 0.7978846
        %v1252 = vmul.f32 %v1184, 0.7978846
        %v1253 = vmul.f32 %v1185, 0.7978846
        %v1254 = vmul.f32 %v1186, 0.7978846
        %v1255 = vmul.f32 %v1187, 0.7978846
        %v1256 = vmul.f32 %v1188, 0.7978846
        %v1257 = vmul.f32 %v1189, 0.7978846
        %v1258 = vmul.f32 %v1190, 0.7978846
        %v1259 = vmul.f32 %v1191, 0.7978846
        %v1260 = vmul.f32 %v1192, 0.7978846
        %v1261 = vmul.f32 %v1193, 0.7978846
        %v1262 = vmul.f32 %v1194, 0.7978846
        %v1263 = vmul.f32 %v1195, 0.7978846
        %v1264 = vtanh.pop %v1196
        %v1265 = vtanh.pop %v1197
        %v1266 = vtanh.pop %v1198
        %v1267 = vtanh.pop %v1199
        %v1268 = vtanh.pop %v1200
        %v1269 = vtanh.pop %v1201
        %v1270 = vtanh.pop %v1202
        %v1271 = vtanh.pop %v1203
        %v1272 = vtanh.pop %v1204
        %v1273 = vtanh.pop %v1205
        %v1274 = vtanh.pop %v1206
        %v1275 = vtanh.pop %v1207
        %v1276 = vtanh.pop %v1208
        %v1277 = vtanh.pop %v1209
        %v1278 = vtanh.pop %v1210
        %v1279 = vtanh.pop %v1211
        %v1280 = vtanh.pop %v1212
        %v1281 = vtanh.pop %v1213
        %v1282 = vtanh.pop %v1214
        %v1283 = vtanh.pop %v1215
        %v1284 = vtanh.pop %v1216
        %v1285 = vtanh.pop %v1217
        %v1286 = vtanh.pop %v1218
        %v1287 = vtanh.pop %v1219
        %v1288 = vtanh.pop %v1220
        %v1289 = vtanh.pop %v1221
        %v1290 = vtanh.pop %v1222
        %v1291 = vtanh.pop %v1223
        %v1292 = vtanh.pop %v1224
        %v1293 = vtanh.pop %v1225
        %v1294 = vtanh.pop %v1226
        %v1295 = vtanh.pop %v1227
        %v1296 = vtanh.pop %v1228
        %v1297 = vtanh.pop %v1229
        %v1298 = vtanh.pop %v1230
        %v1299 = vtanh.pop %v1231
        %v1300 = vtanh.pop %v1232
        %v1301 = vtanh.pop %v1233
        %v1302 = vtanh.pop %v1234
        %v1303 = vtanh.pop %v1235
        %v1304 = vtanh.pop %v1236
        %v1305 = vtanh.pop %v1237
        %v1306 = vtanh.pop %v1238
        %v1307 = vtanh.pop %v1239
        %v1308 = vtanh.pop %v1240
        %v1309 = vtanh.pop %v1241
        %v1310 = vtanh.pop %v1242
        %v1311 = vtanh.pop %v1243
        %v1312 = vtanh.pop %v1244
        %v1313 = vtanh.pop %v1245
        %v1314 = vtanh.pop %v1246
        %v1315 = vtanh.pop %v1247
        %v1316 = vtanh.pop %v1248
        %v1317 = vtanh.pop %v1249
        %v1318 = vtanh.pop %v1250
        %v1319 = vtanh.pop %v1251
        %v1320 = vtanh.pop %v1252
        %v1321 = vtanh.pop %v1253
        %v1322 = vtanh.pop %v1254
        %v1323 = vtanh.pop %v1255
        %v1324 = vtanh.pop %v1256
        %v1325 = vtanh.pop %v1257
        %v1326 = vtanh.pop %v1258
        %v1327 = vtanh.pop %v1259
        %v1328 = vtanh.pop %v1260
        %v1329 = vtanh.pop %v1261
        %v1330 = vtanh.pop %v1262
        %v1331 = vtanh.pop %v1263
        %v1332 = vadd.f32 %v1264, 1.0
        %v1333 = vadd.f32 %v1265, 1.0
        %v1334 = vadd.f32 %v1266, 1.0
        %v1335 = vadd.f32 %v1267, 1.0
        %v1336 = vadd.f32 %v1268, 1.0
        %v1337 = vadd.f32 %v1269, 1.0
        %v1338 = vadd.f32 %v1270, 1.0
        %v1339 = vadd.f32 %v1271, 1.0
        %v1340 = vadd.f32 %v1272, 1.0
        %v1341 = vadd.f32 %v1273, 1.0
        %v1342 = vadd.f32 %v1274, 1.0
        %v1343 = vadd.f32 %v1275, 1.0
        %v1344 = vadd.f32 %v1276, 1.0
        %v1345 = vadd.f32 %v1277, 1.0
        %v1346 = vadd.f32 %v1278, 1.0
        %v1347 = vadd.f32 %v1279, 1.0
        %v1348 = vadd.f32 %v1280, 1.0
        %v1349 = vadd.f32 %v1281, 1.0
        %v1350 = vadd.f32 %v1282, 1.0
        %v1351 = vadd.f32 %v1283, 1.0
        %v1352 = vadd.f32 %v1284, 1.0
        %v1353 = vadd.f32 %v1285, 1.0
        %v1354 = vadd.f32 %v1286, 1.0
        %v1355 = vadd.f32 %v1287, 1.0
        %v1356 = vadd.f32 %v1288, 1.0
        %v1357 = vadd.f32 %v1289, 1.0
        %v1358 = vadd.f32 %v1290, 1.0
        %v1359 = vadd.f32 %v1291, 1.0
        %v1360 = vadd.f32 %v1292, 1.0
        %v1361 = vadd.f32 %v1293, 1.0
        %v1362 = vadd.f32 %v1294, 1.0
        %v1363 = vadd.f32 %v1295, 1.0
        %v1364 = vadd.f32 %v1296, 1.0
        %v1365 = vadd.f32 %v1297, 1.0
        %v1366 = vadd.f32 %v1298, 1.0
        %v1367 = vadd.f32 %v1299, 1.0
        %v1368 = vadd.f32 %v1300, 1.0
        %v1369 = vadd.f32 %v1301, 1.0
        %v1370 = vadd.f32 %v1302, 1.0
        %v1371 = vadd.f32 %v1303, 1.0
        %v1372 = vadd.f32 %v1304, 1.0
        %v1373 = vadd.f32 %v1305, 1.0
        %v1374 = vadd.f32 %v1306, 1.0
        %v1375 = vadd.f32 %v1307, 1.0
        %v1376 = vadd.f32 %v1308, 1.0
        %v1377 = vadd.f32 %v1309, 1.0
        %v1378 = vadd.f32 %v1310, 1.0
        %v1379 = vadd.f32 %v1311, 1.0
        %v1380 = vadd.f32 %v1312, 1.0
        %v1381 = vadd.f32 %v1313, 1.0
        %v1382 = vadd.f32 %v1314, 1.0
        %v1383 = vadd.f32 %v1315, 1.0
        %v1384 = vadd.f32 %v1316, 1.0
        %v1385 = vadd.f32 %v1317, 1.0
        %v1386 = vadd.f32 %v1318, 1.0
        %v1387 = vadd.f32 %v1319, 1.0
        %v1388 = vadd.f32 %v1320, 1.0
        %v1389 = vadd.f32 %v1321, 1.0
        %v1390 = vadd.f32 %v1322, 1.0
        %v1391 = vadd.f32 %v1323, 1.0
        %v1392 = vadd.f32 %v1324, 1.0
        %v1393 = vadd.f32 %v1325, 1.0
        %v1394 = vadd.f32 %v1326, 1.0
        %v1395 = vadd.f32 %v1327, 1.0
        %v1396 = vadd.f32 %v1328, 1.0
        %v1397 = vadd.f32 %v1329, 1.0
        %v1398 = vadd.f32 %v1330, 1.0
        %v1399 = vadd.f32 %v1331, 1.0
        %v1400 = vmul.f32 %v1332, 0.5
        %v1401 = vmul.f32 %v1333, 0.5
        %v1402 = vmul.f32 %v1334, 0.5
        %v1403 = vmul.f32 %v1335, 0.5
        %v1404 = vmul.f32 %v1336, 0.5
        %v1405 = vmul.f32 %v1337, 0.5
        %v1406 = vmul.f32 %v1338, 0.5
        %v1407 = vmul.f32 %v1339, 0.5
        %v1408 = vmul.f32 %v1340, 0.5
        %v1409 = vmul.f32 %v1341, 0.5
        %v1410 = vmul.f32 %v1342, 0.5
        %v1411 = vmul.f32 %v1343, 0.5
        %v1412 = vmul.f32 %v1344, 0.5
        %v1413 = vmul.f32 %v1345, 0.5
        %v1414 = vmul.f32 %v1346, 0.5
        %v1415 = vmul.f32 %v1347, 0.5
        %v1416 = vmul.f32 %v1348, 0.5
        %v1417 = vmul.f32 %v1349, 0.5
        %v1418 = vmul.f32 %v1350, 0.5
        %v1419 = vmul.f32 %v1351, 0.5
        %v1420 = vmul.f32 %v1352, 0.5
        %v1421 = vmul.f32 %v1353, 0.5
        %v1422 = vmul.f32 %v1354, 0.5
        %v1423 = vmul.f32 %v1355, 0.5
        %v1424 = vmul.f32 %v1356, 0.5
        %v1425 = vmul.f32 %v1357, 0.5
        %v1426 = vmul.f32 %v1358, 0.5
        %v1427 = vmul.f32 %v1359, 0.5
        %v1428 = vmul.f32 %v1360, 0.5
        %v1429 = vmul.f32 %v1361, 0.5
        %v1430 = vmul.f32 %v1362, 0.5
        %v1431 = vmul.f32 %v1363, 0.5
        %v1432 = vmul.f32 %v1364, 0.5
        %v1433 = vmul.f32 %v1365, 0.5
        %v1434 = vmul.f32 %v1366, 0.5
        %v1435 = vmul.f32 %v1367, 0.5
        %v1436 = vmul.f32 %v1368, 0.5
        %v1437 = vmul.f32 %v1369, 0.5
        %v1438 = vmul.f32 %v1370, 0.5
        %v1439 = vmul.f32 %v1371, 0.5
        %v1440 = vmul.f32 %v1372, 0.5
        %v1441 = vmul.f32 %v1373, 0.5
        %v1442 = vmul.f32 %v1374, 0.5
        %v1443 = vmul.f32 %v1375, 0.5
        %v1444 = vmul.f32 %v1376, 0.5
        %v1445 = vmul.f32 %v1377, 0.5
        %v1446 = vmul.f32 %v1378, 0.5
        %v1447 = vmul.f32 %v1379, 0.5
        %v1448 = vmul.f32 %v1380, 0.5
        %v1449 = vmul.f32 %v1381, 0.5
        %v1450 = vmul.f32 %v1382, 0.5
        %v1451 = vmul.f32 %v1383, 0.5
        %v1452 = vmul.f32 %v1384, 0.5
        %v1453 = vmul.f32 %v1385, 0.5
        %v1454 = vmul.f32 %v1386, 0.5
        %v1455 = vmul.f32 %v1387, 0.5
        %v1456 = vmul.f32 %v1388, 0.5
        %v1457 = vmul.f32 %v1389, 0.5
        %v1458 = vmul.f32 %v1390, 0.5
        %v1459 = vmul.f32 %v1391, 0.5
        %v1460 = vmul.f32 %v1392, 0.5
        %v1461 = vmul.f32 %v1393, 0.5
        %v1462 = vmul.f32 %v1394, 0.5
        %v1463 = vmul.f32 %v1395, 0.5
        %v1464 = vmul.f32 %v1396, 0.5
        %v1465 = vmul.f32 %v1397, 0.5
        %v1466 = vmul.f32 %v1398, 0.5
        %v1467 = vmul.f32 %v1399, 0.5
        %v1468 = vmul.f32 %v717, %v1400
        %v1469 = vmul.f32 %v719, %v1401
        %v1470 = vmul.f32 %v838, %v1402
        %v1471 = vmul.f32 %v840, %v1403
        %v1472 = vmul.f32 %v721, %v1404
        %v1473 = vmul.f32 %v723, %v1405
        %v1474 = vmul.f32 %v842, %v1406
        %v1475 = vmul.f32 %v844, %v1407
        %v1476 = vmul.f32 %v727, %v1408
        %v1477 = vmul.f32 %v729, %v1409
        %v1478 = vmul.f32 %v848, %v1410
        %v1479 = vmul.f32 %v850, %v1411
        %v1480 = vmul.f32 %v731, %v1412
        %v1481 = vmul.f32 %v733, %v1413
        %v1482 = vmul.f32 %v852, %v1414
        %v1483 = vmul.f32 %v854, %v1415
        %v1484 = vmul.f32 %v737, %v1416
        %v1485 = vmul.f32 %v739, %v1417
        %v1486 = vmul.f32 %v858, %v1418
        %v1487 = vmul.f32 %v860, %v1419
        %v1488 = vmul.f32 %v741, %v1420
        %v1489 = vmul.f32 %v743, %v1421
        %v1490 = vmul.f32 %v862, %v1422
        %v1491 = vmul.f32 %v864, %v1423
        %v1492 = vmul.f32 %v747, %v1424
        %v1493 = vmul.f32 %v749, %v1425
        %v1494 = vmul.f32 %v868, %v1426
        %v1495 = vmul.f32 %v870, %v1427
        %v1496 = vmul.f32 %v751, %v1428
        %v1497 = vmul.f32 %v753, %v1429
        %v1498 = vmul.f32 %v872, %v1430
        %v1499 = vmul.f32 %v874, %v1431
        %v1500 = vmul.f32 %v757, %v1432
        %v1501 = vmul.f32 %v759, %v1433
        %v1502 = vmul.f32 %v878, %v1434
        %v1503 = vmul.f32 %v880, %v1435
        %v1504 = vmul.f32 %v761, %v1436
        %v1505 = vmul.f32 %v763, %v1437
        %v1506 = vmul.f32 %v882, %v1438
        %v1507 = vmul.f32 %v884, %v1439
        %v1508 = vmul.f32 %v767, %v1440
        %v1509 = vmul.f32 %v769, %v1441
        %v1510 = vmul.f32 %v888, %v1442
        %v1511 = vmul.f32 %v890, %v1443
        %v1512 = vmul.f32 %v771, %v1444
        %v1513 = vmul.f32 %v773, %v1445
        %v1514 = vmul.f32 %v892, %v1446
        %v1515 = vmul.f32 %v894, %v1447
        %v1516 = vmul.f32 %v777, %v1448
        %v1517 = vmul.f32 %v779, %v1449
        %v1518 = vmul.f32 %v898, %v1450
        %v1519 = vmul.f32 %v900, %v1451
        %v1520 = vmul.f32 %v781, %v1452
        %v1521 = vmul.f32 %v783, %v1453
        %v1522 = vmul.f32 %v902, %v1454
        %v1523 = vmul.f32 %v904, %v1455
        %v1524 = vmul.f32 %v787, %v1456
        %v1525 = vmul.f32 %v789, %v1457
        %v1526 = vmul.f32 %v908, %v1458
        %v1527 = vmul.f32 %v910, %v1459
        %v1528 = vmul.f32 %v791, %v1460
        %v1529 = vmul.f32 %v793, %v1461
        %v1530 = vmul.f32 %v912, %v1462
        %v1531 = vmul.f32 %v914, %v1463
        %v1532 = vmul.f32 %v797, %v1464
        %v1533 = vmul.f32 %v799, %v1465
        %v1534 = vmul.f32 %v918, %v1466
        %v1535 = vmul.f32 %v920, %v1467
        %v1536 = vpack.c.bf16 %v1472, %v1468
        %v1537 = vpack.c.bf16 %v1473, %v1469
        %v1538 = vpack.c.bf16 %v1474, %v1470
        %v1539 = vpack.c.bf16 %v1475, %v1471
        %v1540 = vpack.c.bf16 %v1480, %v1476
        %v1541 = vpack.c.bf16 %v1481, %v1477
        %v1542 = vpack.c.bf16 %v1482, %v1478
        %v1543 = vpack.c.bf16 %v1483, %v1479
        %v1544 = vpack.c.bf16 %v1488, %v1484
        %v1545 = vpack.c.bf16 %v1489, %v1485
        %v1546 = vpack.c.bf16 %v1490, %v1486
        %v1547 = vpack.c.bf16 %v1491, %v1487
        %v1548 = vpack.c.bf16 %v1496, %v1492
        %v1549 = vpack.c.bf16 %v1497, %v1493
        %v1550 = vpack.c.bf16 %v1498, %v1494
        %v1551 = vpack.c.bf16 %v1499, %v1495
        %v1552 = vpack.c.bf16 %v1504, %v1500
        %v1553 = vpack.c.bf16 %v1505, %v1501
        %v1554 = vpack.c.bf16 %v1506, %v1502
        %v1555 = vpack.c.bf16 %v1507, %v1503
        %v1556 = vpack.c.bf16 %v1512, %v1508
        %v1557 = vpack.c.bf16 %v1513, %v1509
        %v1558 = vpack.c.bf16 %v1514, %v1510
        %v1559 = vpack.c.bf16 %v1515, %v1511
        %v1560 = vpack.c.bf16 %v1520, %v1516
        %v1561 = vpack.c.bf16 %v1521, %v1517
        %v1562 = vpack.c.bf16 %v1522, %v1518
        %v1563 = vpack.c.bf16 %v1523, %v1519
        %v1564 = vpack.c.bf16 %v1528, %v1524
        %v1565 = vpack.c.bf16 %v1529, %v1525
        %v1566 = vpack.c.bf16 %v1530, %v1526
        %v1567 = vpack.c.bf16 %v1531, %v1527
        %v1568 = vpack.c.bf16 %v1532, %v1532
        %v1569 = vpack.c.bf16 %v1533, %v1533
        %v1570 = vpack.c.bf16 %v1534, %v1534
        %v1571 = vpack.c.bf16 %v1535, %v1535
        %v1572 = vld [vmem:[%s342] sm:$0xf]
        %v1573 = vld [vmem:[%s342 + $0x4] sm:$0xf]
        %v1574 = vld [vmem:[%s342 + $0x8] sm:$0xf]
        %v1575 = vld [vmem:[%s342 + $0xc] sm:$0xf]
        %v1576 = vld [vmem:[%s342 + $0x10] sm:$0xf]
        %v1577 = vld [vmem:[%s342 + $0x14] sm:$0xf]
        %v1578 = vld [vmem:[%s342 + $0x18] sm:$0xf]
        %v1579 = vld [vmem:[%s342 + $0x1c] sm:$0xf]
        %v1580 = vld [vmem:[%s342 + $0x20] sm:$0xf]
        %v1581 = vld [vmem:[%s342 + $0x24] sm:$0xf]
        %v1582 = vld [vmem:[%s342 + $0x28] sm:$0xf]
        %v1583 = vld [vmem:[%s342 + $0x2c] sm:$0xf]
        %v1584 = vld [vmem:[%s342 + $0x30] sm:$0xf]
        %v1585 = vld [vmem:[%s342 + $0x34] sm:$0xf]
        %v1586 = vld [vmem:[%s342 + $0x38] sm:$0xf]
        %v1587 = vld [vmem:[%s342 + $0x3c] sm:$0xf]
        %v1588 = vld [vmem:[%s342 + $0x40] sm:$0xf]
        %v1589 = vld [vmem:[%s342 + $0x44] sm:$0xf]
        %v1590 = vld [vmem:[%s342 + $0x48] sm:$0xf]
        %v1591 = vld [vmem:[%s342 + $0x4c] sm:$0xf]
        %v1592 = vld [vmem:[%s342 + $0x50] sm:$0xf]
        %v1593 = vld [vmem:[%s342 + $0x54] sm:$0xf]
        %v1594 = vld [vmem:[%s342 + $0x58] sm:$0xf]
        %v1595 = vld [vmem:[%s342 + $0x5c] sm:$0xf]
        %v1596 = vld [vmem:[%s342 + $0x60] sm:$0xf]
        %v1597 = vld [vmem:[%s342 + $0x64] sm:$0xf]
        %v1598 = vld [vmem:[%s342 + $0x68] sm:$0xf]
        %v1599 = vld [vmem:[%s342 + $0x6c] sm:$0xf]
        %v1600 = vld [vmem:[%s342 + $0x70] sm:$0xf]
        %v1601 = vld [vmem:[%s342 + $0x74] sm:$0xf]
        %v1602 = vld [vmem:[%s342 + $0x78] sm:$0xf]
        %v1603 = vld [vmem:[%s342 + $0x7c] sm:$0xf]
        %v1604 = vld [vmem:[%s342 + $0x80] sm:$0xf]
        %v1605 = vld [vmem:[%s342 + $0x84] sm:$0xf]
        %v1606 = vld [vmem:[%s342 + $0x88] sm:$0xf]
        %v1607 = vld [vmem:[%s342 + $0x8c] sm:$0xf]
        %v1608 = vld [vmem:[%s342 + $0x90] sm:$0xf]
        %v1609 = vld [vmem:[%s342 + $0x94] sm:$0xf]
        %v1610 = vld [vmem:[%s342 + $0x98] sm:$0xf]
        %v1611 = vld [vmem:[%s342 + $0x9c] sm:$0xf]
        %v1612 = vld [vmem:[%s342 + $0xa0] sm:$0xf]
        %v1613 = vld [vmem:[%s342 + $0xa4] sm:$0xf]
        %v1614 = vld [vmem:[%s342 + $0xa8] sm:$0xf]
        %v1615 = vld [vmem:[%s342 + $0xac] sm:$0xf]
        %v1616 = vld [vmem:[%s342 + $0xb0] sm:$0xf]
        %v1617 = vld [vmem:[%s342 + $0xb4] sm:$0xf]
        %v1618 = vld [vmem:[%s342 + $0xb8] sm:$0xf]
        %v1619 = vld [vmem:[%s342 + $0xbc] sm:$0xf]
        %v1620 = vld [vmem:[%s342 + $0xc0] sm:$0xf]
        %v1621 = vld [vmem:[%s342 + $0xc4] sm:$0xf]
        %v1622 = vld [vmem:[%s342 + $0xc8] sm:$0xf]
        %v1623 = vld [vmem:[%s342 + $0xcc] sm:$0xf]
        %v1624 = vld [vmem:[%s342 + $0xd0] sm:$0xf]
        %v1625 = vld [vmem:[%s342 + $0xd4] sm:$0xf]
        %v1626 = vld [vmem:[%s342 + $0xd8] sm:$0xf]
        %v1627 = vld [vmem:[%s342 + $0xdc] sm:$0xf]
        %v1628 = vld [vmem:[%s342 + $0xe0] sm:$0xf]
        %v1629 = vld [vmem:[%s342 + $0xe4] sm:$0xf]
        %v1630 = vld [vmem:[%s342 + $0xe8] sm:$0xf]
        %v1631 = vld [vmem:[%s342 + $0xec] sm:$0xf]
        %v1632 = vld [vmem:[%s342 + $0xf0] sm:$0xf]
        %v1633 = vld [vmem:[%s342 + $0xf4] sm:$0xf]
        %v1634 = vld [vmem:[%s342 + $0xf8] sm:$0xf]
        %v1635 = vld [vmem:[%s342 + $0xfc] sm:$0xf]
        %v1636 = vld [vmem:[%s395] sm:$0x1]
        %v1638 = vlaneseq
        %v1639 = vshrl.u32 %v1638, 7
        %v1640 = vsub.s32 0, %v1639
        %v1641 = vrot.slane %v1636, %v1640
        %v1707 = vunpack.c.l.b16 %v1572
        %v1708 = vunpack.c.l.b16 %v1573
        %v1709 = vunpack.c.l.b16 %v1574
        %v1710 = vunpack.c.l.b16 %v1575
        %v1711 = vunpack.c.l.b16 %v1576
        %v1712 = vunpack.c.l.b16 %v1577
        %v1713 = vunpack.c.l.b16 %v1578
        %v1714 = vunpack.c.l.b16 %v1579
        %v1715 = vunpack.c.l.b16 %v1580
        %v1716 = vunpack.c.l.b16 %v1581
        %v1717 = vunpack.c.l.b16 %v1582
        %v1718 = vunpack.c.l.b16 %v1583
        %v1719 = vunpack.c.l.b16 %v1584
        %v1720 = vunpack.c.l.b16 %v1585
        %v1721 = vunpack.c.l.b16 %v1586
        %v1722 = vunpack.c.l.b16 %v1587
        %v1723 = vunpack.c.l.b16 %v1588
        %v1724 = vunpack.c.l.b16 %v1589
        %v1725 = vunpack.c.l.b16 %v1590
        %v1726 = vunpack.c.l.b16 %v1591
        %v1727 = vunpack.c.l.b16 %v1592
        %v1728 = vunpack.c.l.b16 %v1593
        %v1729 = vunpack.c.l.b16 %v1594
        %v1730 = vunpack.c.l.b16 %v1595
        %v1731 = vunpack.c.l.b16 %v1596
        %v1732 = vunpack.c.l.b16 %v1597
        %v1733 = vunpack.c.l.b16 %v1598
        %v1734 = vunpack.c.l.b16 %v1599
        %v1735 = vunpack.c.l.b16 %v1600
        %v1736 = vunpack.c.l.b16 %v1601
        %v1737 = vunpack.c.l.b16 %v1602
        %v1738 = vunpack.c.l.b16 %v1603
        %v1739 = vunpack.c.l.b16 %v1604
        %v1740 = vunpack.c.l.b16 %v1605
        %v1741 = vunpack.c.l.b16 %v1606
        %v1742 = vunpack.c.l.b16 %v1607
        %v1743 = vunpack.c.l.b16 %v1608
        %v1744 = vunpack.c.l.b16 %v1609
        %v1745 = vunpack.c.l.b16 %v1610
        %v1746 = vunpack.c.l.b16 %v1611
        %v1747 = vunpack.c.l.b16 %v1612
        %v1748 = vunpack.c.l.b16 %v1613
        %v1749 = vunpack.c.l.b16 %v1614
        %v1750 = vunpack.c.l.b16 %v1615
        %v1751 = vunpack.c.l.b16 %v1616
        %v1752 = vunpack.c.l.b16 %v1617
        %v1753 = vunpack.c.l.b16 %v1618
        %v1754 = vunpack.c.l.b16 %v1619
        %v1755 = vunpack.c.l.b16 %v1620
        %v1756 = vunpack.c.l.b16 %v1621
        %v1757 = vunpack.c.l.b16 %v1622
        %v1758 = vunpack.c.l.b16 %v1623
        %v1759 = vunpack.c.l.b16 %v1624
        %v1760 = vunpack.c.l.b16 %v1625
        %v1761 = vunpack.c.l.b16 %v1626
        %v1762 = vunpack.c.l.b16 %v1627
        %v1763 = vunpack.c.l.b16 %v1628
        %v1764 = vunpack.c.l.b16 %v1629
        %v1765 = vunpack.c.l.b16 %v1630
        %v1766 = vunpack.c.l.b16 %v1631
        %v1767 = vunpack.c.l.b16 %v1632
        %v1768 = vunpack.c.l.b16 %v1633
        %v1769 = vunpack.c.l.b16 %v1634
        %v1770 = vunpack.c.l.b16 %v1635
        %v1771 = vpack.c.b16 %v1708, %v1707
        %v1772 = vpack.c.b16 %v1710, %v1709
        %v1773 = vpack.c.b16 %v1712, %v1711
        %v1774 = vpack.c.b16 %v1714, %v1713
        %v1775 = vpack.c.b16 %v1716, %v1715
        %v1776 = vpack.c.b16 %v1718, %v1717
        %v1777 = vpack.c.b16 %v1720, %v1719
        %v1778 = vpack.c.b16 %v1722, %v1721
        %v1779 = vpack.c.b16 %v1724, %v1723
        %v1780 = vpack.c.b16 %v1726, %v1725
        %v1781 = vpack.c.b16 %v1728, %v1727
        %v1782 = vpack.c.b16 %v1730, %v1729
        %v1783 = vpack.c.b16 %v1732, %v1731
        %v1784 = vpack.c.b16 %v1734, %v1733
        %v1785 = vpack.c.b16 %v1736, %v1735
        %v1786 = vpack.c.b16 %v1738, %v1737
        %v1787 = vpack.c.b16 %v1740, %v1739
        %v1788 = vpack.c.b16 %v1742, %v1741
        %v1789 = vpack.c.b16 %v1744, %v1743
        %v1790 = vpack.c.b16 %v1746, %v1745
        %v1791 = vpack.c.b16 %v1748, %v1747
        %v1792 = vpack.c.b16 %v1750, %v1749
        %v1793 = vpack.c.b16 %v1752, %v1751
        %v1794 = vpack.c.b16 %v1754, %v1753
        %v1795 = vpack.c.b16 %v1756, %v1755
        %v1796 = vpack.c.b16 %v1758, %v1757
        %v1797 = vpack.c.b16 %v1760, %v1759
        %v1798 = vpack.c.b16 %v1762, %v1761
        %v1799 = vpack.c.b16 %v1764, %v1763
        %v1800 = vpack.c.b16 %v1766, %v1765
        %v1801 = vpack.c.b16 %v1768, %v1767
        %v1802 = vpack.c.b16 %v1770, %v1769
        %1835 = vmatprep.subr.bf16.mxu0 0
        %1836 = vmatpush1.bf16.msra.mxu0 %v1771
        %1837 = vmatprep.subr.bf16.mxu0 0
        %1838 = vmatpush1.bf16.msra.mxu0 %v1772
        %1839 = vmatprep.subr.bf16.mxu0 0
        %1840 = vmatpush1.bf16.msra.mxu0 %v1773
        %1841 = vmatprep.subr.bf16.mxu0 0
        %1842 = vmatpush1.bf16.msra.mxu0 %v1774
        %1843 = vmatprep.subr.bf16.mxu0 0
        %1844 = vmatpush1.bf16.msra.mxu0 %v1775
        %1845 = vmatprep.subr.bf16.mxu0 0
        %1846 = vmatpush1.bf16.msra.mxu0 %v1776
        %1847 = vmatprep.subr.bf16.mxu0 0
        %1848 = vmatpush1.bf16.msra.mxu0 %v1777
        %1849 = vmatprep.subr.bf16.mxu0 0
        %1850 = vmatpush1.bf16.msra.mxu0 %v1778
        %1851 = vmatprep.subr.bf16.mxu0 0
        %1852 = vmatpush1.bf16.msra.mxu0 %v1779
        %1853 = vmatprep.subr.bf16.mxu0 0
        %1854 = vmatpush1.bf16.msra.mxu0 %v1780
        %1855 = vmatprep.subr.bf16.mxu0 0
        %1856 = vmatpush1.bf16.msra.mxu0 %v1781
        %1857 = vmatprep.subr.bf16.mxu0 0
        %1858 = vmatpush1.bf16.msra.mxu0 %v1782
        %1859 = vmatprep.subr.bf16.mxu0 0
        %1860 = vmatpush1.bf16.msra.mxu0 %v1783
        %1861 = vmatprep.subr.bf16.mxu0 0
        %1862 = vmatpush1.bf16.msra.mxu0 %v1784
        %1863 = vmatprep.subr.bf16.mxu0 0
        %1864 = vmatpush1.bf16.msra.mxu0 %v1785
        %1865 = vmatprep.subr.bf16.mxu0 0
        %1866 = vmatpush1.bf16.msra.mxu0 %v1786
        %1867 = vmatprep.mubr.bf16.mxu0 %v1537
        %1868 = vmatmul.mubr.bf16.gmra.mrb[0].mxu0 %v1536
        %v1869 = vpop.f32.mrb[0].mxu0
        %v1870 = vadd.f32 %v1641, %v1869
        %v1871 = vpop.f32.mrb[0].mxu0
        %v1872 = vpop.f32.mrb[0].mxu0
        %v1873 = vadd.f32 %v1641, %v1872
        %v1874 = vpop.f32.mrb[0].mxu0
        %1875 = vmatprep.mubr.bf16.mxu0 %v1541
        %1876 = vmatmul.mubr.bf16.gmra.mrb[0].mxu0 %v1540
        %v1877 = vpop.f32.mrb[0].mxu0
        %v1878 = vadd.f32 %v1641, %v1877
        %v1879 = vpop.f32.mrb[0].mxu0
        %v1880 = vpop.f32.mrb[0].mxu0
        %v1881 = vadd.f32 %v1641, %v1880
        %v1882 = vpop.f32.mrb[0].mxu0
        %1883 = vmatprep.mubr.bf16.mxu0 %v1545
        %1884 = vmatmul.mubr.bf16.gmra.mrb[0].mxu0 %v1544
        %v1885 = vpop.f32.mrb[0].mxu0
        %v1886 = vadd.f32 %v1641, %v1885
        %v1887 = vpop.f32.mrb[0].mxu0
        %v1888 = vpop.f32.mrb[0].mxu0
        %v1889 = vadd.f32 %v1641, %v1888
        %v1890 = vpop.f32.mrb[0].mxu0
        %1891 = vmatprep.mubr.bf16.mxu0 %v1549
        %1892 = vmatmul.mubr.bf16.gmra.mrb[0].mxu0 %v1548
        %v1893 = vpop.f32.mrb[0].mxu0
        %v1894 = vadd.f32 %v1641, %v1893
        %v1895 = vpop.f32.mrb[0].mxu0
        %v1896 = vpop.f32.mrb[0].mxu0
        %v1897 = vadd.f32 %v1641, %v1896
        %v1898 = vpop.f32.mrb[0].mxu0
        %1899 = vmatprep.mubr.bf16.mxu0 %v1553
        %1900 = vmatmul.mubr.bf16.gmra.mrb[0].mxu0 %v1552
        %v1901 = vpop.f32.mrb[0].mxu0
        %v1902 = vadd.f32 %v1641, %v1901
        %v1903 = vpop.f32.mrb[0].mxu0
        %v1904 = vpop.f32.mrb[0].mxu0
        %v1905 = vadd.f32 %v1641, %v1904
        %v1906 = vpop.f32.mrb[0].mxu0
        %1907 = vmatprep.mubr.bf16.mxu0 %v1557
        %1908 = vmatmul.mubr.bf16.gmra.mrb[0].mxu0 %v1556
        %v1909 = vpop.f32.mrb[0].mxu0
        %v1910 = vadd.f32 %v1641, %v1909
        %v1911 = vpop.f32.mrb[0].mxu0
        %v1912 = vpop.f32.mrb[0].mxu0
        %v1913 = vadd.f32 %v1641, %v1912
        %v1914 = vpop.f32.mrb[0].mxu0
        %1915 = vmatprep.mubr.bf16.mxu0 %v1561
        %1916 = vmatmul.mubr.bf16.gmra.mrb[0].mxu0 %v1560
        %v1917 = vpop.f32.mrb[0].mxu0
        %v1918 = vadd.f32 %v1641, %v1917
        %v1919 = vpop.f32.mrb[0].mxu0
        %v1920 = vpop.f32.mrb[0].mxu0
        %v1921 = vadd.f32 %v1641, %v1920
        %v1922 = vpop.f32.mrb[0].mxu0
        %1923 = vmatprep.mubr.bf16.mxu0 %v1565
        %1924 = vmatmul.mubr.bf16.gmra.mrb[0].mxu0 %v1564
        %v1925 = vpop.f32.mrb[0].mxu0
        %v1926 = vadd.f32 %v1641, %v1925
        %v1927 = vpop.f32.mrb[0].mxu0
        %v1928 = vpop.f32.mrb[0].mxu0
        %v1929 = vadd.f32 %v1641, %v1928
        %v1930 = vpop.f32.mrb[0].mxu0
        %1931 = vmatprep.mubr.bf16.mxu0 %v1569
        %1932 = vmatmul.mubr.bf16.gmra.mrb[0].mxu0 %v1568
        %v1933 = vpop.f32.mrb[0].mxu0
        %v1934 = vadd.f32 %v1641, %v1933
        %v1935 = vpop.f32.mrb[0].mxu0
        %v1936 = vpop.f32.mrb[0].mxu0
        %v1937 = vpop.f32.mrb[0].mxu0
        %1938 = vdwg.mxu0
        %1939 = vmatprep.subr.bf16.mxu0 0
        %1940 = vmatpush1.bf16.msra.mxu0 %v1787
        %1941 = vmatprep.subr.bf16.mxu0 0
        %1942 = vmatpush1.bf16.msra.mxu0 %v1788
        %1943 = vmatprep.subr.bf16.mxu0 0
        %1944 = vmatpush1.bf16.msra.mxu0 %v1789
        %1945 = vmatprep.subr.bf16.mxu0 0
        %1946 = vmatpush1.bf16.msra.mxu0 %v1790
        %1947 = vmatprep.subr.bf16.mxu0 0
        %1948 = vmatpush1.bf16.msra.mxu0 %v1791
        %1949 = vmatprep.subr.bf16.mxu0 0
        %1950 = vmatpush1.bf16.msra.mxu0 %v1792
        %1951 = vmatprep.subr.bf16.mxu0 0
        %1952 = vmatpush1.bf16.msra.mxu0 %v1793
        %1953 = vmatprep.subr.bf16.mxu0 0
        %1954 = vmatpush1.bf16.msra.mxu0 %v1794
        %1955 = vmatprep.subr.bf16.mxu0 0
        %1956 = vmatpush1.bf16.msra.mxu0 %v1795
        %1957 = vmatprep.subr.bf16.mxu0 0
        %1958 = vmatpush1.bf16.msra.mxu0 %v1796
        %1959 = vmatprep.subr.bf16.mxu0 0
        %1960 = vmatpush1.bf16.msra.mxu0 %v1797
        %1961 = vmatprep.subr.bf16.mxu0 0
        %1962 = vmatpush1.bf16.msra.mxu0 %v1798
        %1963 = vmatprep.subr.bf16.mxu0 0
        %1964 = vmatpush1.bf16.msra.mxu0 %v1799
        %1965 = vmatprep.subr.bf16.mxu0 0
        %1966 = vmatpush1.bf16.msra.mxu0 %v1800
        %1967 = vmatprep.subr.bf16.mxu0 0
        %1968 = vmatpush1.bf16.msra.mxu0 %v1801
        %1969 = vmatprep.subr.bf16.mxu0 0
        %1970 = vmatpush1.bf16.msra.mxu0 %v1802
        %1971 = vmatprep.mubr.bf16.mxu0 %v1539
        %1972 = vmatmul.mubr.bf16.gmra.mrb[0].mxu0 %v1538
        %v1973 = vpop.f32.mrb[0].mxu0
        %v1974 = vadd.f32 %v1870, %v1973
        %v1975 = vpop.f32.mrb[0].mxu0
        %v1976 = vpop.f32.mrb[0].mxu0
        %v1977 = vadd.f32 %v1873, %v1976
        %v1978 = vpop.f32.mrb[0].mxu0
        %1979 = vmatprep.mubr.bf16.mxu0 %v1543
        %1980 = vmatmul.mubr.bf16.gmra.mrb[0].mxu0 %v1542
        %v1981 = vpop.f32.mrb[0].mxu0
        %v1982 = vadd.f32 %v1878, %v1981
        %v1983 = vpop.f32.mrb[0].mxu0
        %v1984 = vpop.f32.mrb[0].mxu0
        %v1985 = vadd.f32 %v1881, %v1984
        %v1986 = vpop.f32.mrb[0].mxu0
        %1987 = vmatprep.mubr.bf16.mxu0 %v1547
        %1988 = vmatmul.mubr.bf16.gmra.mrb[0].mxu0 %v1546
        %v1989 = vpop.f32.mrb[0].mxu0
        %v1990 = vadd.f32 %v1886, %v1989
        %v1991 = vpop.f32.mrb[0].mxu0
        %v1992 = vpop.f32.mrb[0].mxu0
        %v1993 = vadd.f32 %v1889, %v1992
        %v1994 = vpop.f32.mrb[0].mxu0
        %1995 = vmatprep.mubr.bf16.mxu0 %v1551
        %1996 = vmatmul.mubr.bf16.gmra.mrb[0].mxu0 %v1550
        %v1997 = vpop.f32.mrb[0].mxu0
        %v1998 = vadd.f32 %v1894, %v1997
        %v1999 = vpop.f32.mrb[0].mxu0
        %v2000 = vpop.f32.mrb[0].mxu0
        %v2001 = vadd.f32 %v1897, %v2000
        %v2002 = vpop.f32.mrb[0].mxu0
        %2003 = vmatprep.mubr.bf16.mxu0 %v1555
        %2004 = vmatmul.mubr.bf16.gmra.mrb[0].mxu0 %v1554
        %v2005 = vpop.f32.mrb[0].mxu0
        %v2006 = vadd.f32 %v1902, %v2005
        %v2007 = vpop.f32.mrb[0].mxu0
        %v2008 = vpop.f32.mrb[0].mxu0
        %v2009 = vadd.f32 %v1905, %v2008
        %v2010 = vpop.f32.mrb[0].mxu0
        %2011 = vmatprep.mubr.bf16.mxu0 %v1559
        %2012 = vmatmul.mubr.bf16.gmra.mrb[0].mxu0 %v1558
        %v2013 = vpop.f32.mrb[0].mxu0
        %v2014 = vadd.f32 %v1910, %v2013
        %v2015 = vpop.f32.mrb[0].mxu0
        %v2016 = vpop.f32.mrb[0].mxu0
        %v2017 = vadd.f32 %v1913, %v2016
        %v2018 = vpop.f32.mrb[0].mxu0
        %2019 = vmatprep.mubr.bf16.mxu0 %v1563
        %2020 = vmatmul.mubr.bf16.gmra.mrb[0].mxu0 %v1562
        %v2021 = vpop.f32.mrb[0].mxu0
        %v2022 = vadd.f32 %v1918, %v2021
        %v2023 = vpop.f32.mrb[0].mxu0
        %v2024 = vpop.f32.mrb[0].mxu0
        %v2025 = vadd.f32 %v1921, %v2024
        %v2026 = vpop.f32.mrb[0].mxu0
        %2027 = vmatprep.mubr.bf16.mxu0 %v1567
        %2028 = vmatmul.mubr.bf16.gmra.mrb[0].mxu0 %v1566
        %v2029 = vpop.f32.mrb[0].mxu0
        %v2030 = vadd.f32 %v1926, %v2029
        %v2031 = vpop.f32.mrb[0].mxu0
        %v2032 = vpop.f32.mrb[0].mxu0
        %v2033 = vadd.f32 %v1929, %v2032
        %v2034 = vpop.f32.mrb[0].mxu0
        %2035 = vmatprep.mubr.bf16.mxu0 %v1571
        %2036 = vmatmul.mubr.bf16.gmra.mrb[0].mxu0 %v1570
        %v2037 = vpop.f32.mrb[0].mxu0
        %v2038 = vadd.f32 %v1934, %v2037
        %v2039 = vpop.f32.mrb[0].mxu0
        %v2040 = vpop.f32.mrb[0].mxu0
        %v2041 = vpop.f32.mrb[0].mxu0
        %2042 = vdwg.mxu0
        %2043 = vst [vmem:[%s387] sm:$0xff] %v1974
        %2044 = vst [vmem:[%s387 + $0x8] sm:$0xff] %v1977
        %2045 = vst [vmem:[%s387 + $0x10] sm:$0xff] %v1982
        %2046 = vst [vmem:[%s387 + $0x18] sm:$0xff] %v1985
        %2047 = vst [vmem:[%s387 + $0x20] sm:$0xff] %v1990
        %2048 = vst [vmem:[%s387 + $0x28] sm:$0xff] %v1993
        %2049 = vst [vmem:[%s387 + $0x30] sm:$0xff] %v1998
        %2050 = vst [vmem:[%s387 + $0x38] sm:$0xff] %v2001
        %2051 = vst [vmem:[%s387 + $0x40] sm:$0xff] %v2006
        %2052 = vst [vmem:[%s387 + $0x48] sm:$0xff] %v2009
        %2053 = vst [vmem:[%s387 + $0x50] sm:$0xff] %v2014
        %2054 = vst [vmem:[%s387 + $0x58] sm:$0xff] %v2017
        %2055 = vst [vmem:[%s387 + $0x60] sm:$0xff] %v2022
        %2056 = vst [vmem:[%s387 + $0x68] sm:$0xff] %v2025
        %2057 = vst [vmem:[%s387 + $0x70] sm:$0xff] %v2030
        %2058 = vst [vmem:[%s387 + $0x78] sm:$0xff] %v2033
        %2059 = vst [vmem:[%s387 + $0x80] sm:$0xff] %v2038
        %s2060 = sand.u32 %s179, 1
        %s2061 = scalar_lea.sflag [#allocation6], %s2060
        %s2062 = sand.u32 %s179, 1
        %s2063 = smul.addr %s2062, 136
        %s2064 = scalar_lea.vmem [#allocation12], %s2063
        // Predicated region
        $region57: #{tpu_custom_call.1} parent=39 // pred_check
          %p2065 = pneg %p189
        $region58: #{tpu_custom_call.1} parent=39 // pred_check_branch
          %2067 = sbr.rel (%p2065) target = $region60
        $region59: #{tpu_custom_call.1} parent=39 // pred_region
          %s2068 = smul.u32 17, %s33
          %s2070 = ssub.s32 2176, 2176
          %2071 = vsyncadd %s2061, %s2070
          %s2072 = smul.addr %s2068, 128
          %s2073 = scalar_lea.hbm %s6, %s2072
          %s2074 = sshll.u32 %s2064, 4
          %s2075 = int_to_ptr.vmem [resolvable:$true] %s2074
          %2080 = dma.vmem_to_hbm [thread:$0]  %s2075, 2176, %s2073, %s2061, 128, 128, 8
        $region60: #{tpu_custom_call.1} parent=39 // pred_fallthru
          _
      $region40: #{tpu_custom_call.1} parent=5 // pred_fallthru
        _
      %p2081 = scmp.le.s32.totalorder 2, %s28
      // Predicated region
      $region61: #{tpu_custom_call.1} parent=5 // pred_check
        %p2082 = pneg %p2081
      $region62: #{tpu_custom_call.1} parent=5 // pred_check_branch
        %2084 = sbr.rel (%p2082) target = $region64
      $region63: #{tpu_custom_call.1} parent=5 // pred_region
        %s2085 = ssub.s32 %s28, 2
        // Predicated region
        $region65: #{tpu_custom_call.1} parent=63 // pred_check
          %p2086 = pneg %p195
        $region66: #{tpu_custom_call.1} parent=63 // pred_check_branch
          %2088 = sbr.rel (%p2086) target = $region68
        $region67: #{tpu_custom_call.1} parent=63 // pred_region
          %s2089 = sand.u32 %s180, 1
          %s2090 = scalar_lea.sflag [#allocation6], %s2089
          %s2091 = sand.u32 %s180, 1
          %s2092 = smul.addr %s2091, 136
          %s2093 = scalar_lea.vmem [#allocation12], %s2092
          %2094 = dma.done %s2090, 2176
        $region68: #{tpu_custom_call.1} parent=63 // pred_fallthru
          _
      $region64: #{tpu_custom_call.1} parent=5 // pred_fallthru
        _
    $region6: #{tpu_custom_call.1} parent=1 // loop_footer
      %s32 = sadd.s32 1, %s28
    $region7: #{tpu_custom_call.1} parent=1 // loop_footer_branch
      %27 = sbr.rel target = $region3
    $region8: #{tpu_custom_call.1} parent=1 // loop_exit
      _
    %2095 = vsyncpa [#allocation5], 1
    %s2096 = scalar_lea.sflag [#allocation5], 1
    %2097 = vsyncpa %s2096, 1
    %2098 = vsyncpa [#allocation8], 1
    %s2099 = scalar_lea.sflag [#allocation8], 1
    %2100 = vsyncpa %s2099, 1
    %2101 = vsyncpa [#allocation11], 1
    %s2102 = scalar_lea.sflag [#allocation11], 1
    %2103 = vsyncpa %s2102, 1
    %2104 = vsyncpa [#allocation6], 1
    %s2105 = scalar_lea.sflag [#allocation6], 1
    %2106 = vsyncpa %s2105, 1

</llo_original>
